<compile_context>
chip_gen: v5e
topology: v5e:2x2
jax: 0.10.0
libtpu: 0.0.40
codegen_flags: <defaults>
</compile_context>

<pallas_src>
import functools

import jax
import jax.numpy as jnp
from jax import lax
from jax.experimental import pallas as pl
from jax.experimental.pallas import tpu as pltpu

EPS = 1e-5      # PyTorch BatchNorm2d default
LANE = 128      # TPU lane width
SUBLANE = 8     # TPU sublane width


# ----------------------------------------------------------------------------
# Helpers
# ----------------------------------------------------------------------------
def _round_up(x, m):
    return ((x + m - 1) // m) * m


def _pad_axis(arr, axis, size):
    pad = size - arr.shape[axis]
    if pad <= 0:
        return arr
    widths = [(0, 0)] * arr.ndim
    widths[axis] = (0, pad)
    return jnp.pad(arr, widths)


# ----------------------------------------------------------------------------
# Fused kernel: conv1+bn1+relu -> conv2+bn2+relu -> conv3+bn3+residual+relu
# ----------------------------------------------------------------------------
def _fused_kernel(xp_ref, w1_ref, w2_ref, w3_ref,
                  s1_ref, b1_ref, s2_ref, b2_ref, s3_ref, b3_ref,
                  mask_ref, o_ref, act1_ref, *, tile_h):
    # xp_ref  : (Hp+2, Wp, Cin)   zero-padded NHWC input image (resident)
    # w1_ref  : (Cin, P)          1x1 conv1 (channel-padded)
    # w2_ref  : (9, P, P)         3x3 conv2, taps in ky*3+kx order, (in,out)
    # w3_ref  : (P, Cout)         1x1 conv3
    # s*/b*   : (1, C)            folded BatchNorm scale / bias (f32)
    # mask_ref: (Hp+2, Wp, P)     0/1 mask: zero outside the valid image interior
    # o_ref   : (tile_h, Wt, Cout) output row tile
    # act1_ref: (tile_h+2, Wp, P)  scratch: conv1 activation with a 1-row halo
    th = tile_h
    wp = xp_ref.shape[1]
    cin = xp_ref.shape[2]
    wt = o_ref.shape[1]
    cout = o_ref.shape[2]
    pch = act1_ref.shape[-1]
    cdt = act1_ref.dtype                    # matmul-operand dtype (f32 / bf16)

    row0 = pl.multiple_of(pl.program_id(1) * th, th)

    w1 = w1_ref[...]
    w3 = w3_ref[...]
    s1 = s1_ref[...]; b1 = b1_ref[...]
    s2 = s2_ref[...]; b2 = b2_ref[...]
    s3 = s3_ref[...]; b3 = b3_ref[...]

    # ---- stage 1: conv1 (1x1) + bn1 + relu on tile_h+2 haloed rows ----------
    x2 = xp_ref[pl.ds(row0, th + 2)]                       # (th+2, Wp, Cin)
    x2 = x2.reshape((th + 2) * wp, cin).astype(cdt)
    y1 = jnp.dot(x2, w1, preferred_element_type=jnp.float32)
    y1 = jnp.maximum(y1 * s1 + b1, 0.0).reshape(th + 2, wp, pch)
    # conv2's zero padding applies to the conv1 *activation*: positions outside
    # the valid image interior must be exactly zero, not relu(bn bias).
    y1 = y1 * mask_ref[pl.ds(row0, th + 2)]
    act1_ref[...] = y1.astype(cdt)

    # ---- stage 2: conv2 (3x3) + bn2 + relu over the whole tile --------------
    # TODO(synk): the dx taps could use a pltpu.roll-based im2col with a
    # (3*P, P) weight to cut the number of MXU pushes further.
    acc = jnp.zeros((th * wt, pch), jnp.float32)
    for dy in range(3):
        band = act1_ref[dy:dy + th]                        # (th, Wp, P)
        for dx in range(3):
            a = band[:, dx:dx + wt, :].reshape(th * wt, pch)
            acc = acc + jnp.dot(a, w2_ref[3 * dy + dx],
                                preferred_element_type=jnp.float32)
    a2 = jnp.maximum(acc * s2 + b2, 0.0).astype(cdt)

    # ---- stage 3: conv3 (1x1) + bn3 + residual + relu -----------------------
    y3 = jnp.dot(a2, w3, preferred_element_type=jnp.float32)
    xr = xp_ref[pl.ds(row0 + 1, th)]                       # (th, Wp, Cin)
    res = xr[:, 1:1 + wt, :].reshape(th * wt, cout).astype(jnp.float32)
    y3 = y3 * s3 + b3 + res
    o_ref[...] = jnp.maximum(y3, 0.0).reshape(th, wt, cout).astype(o_ref.dtype)


def _fused_bottleneck_call(xp, mask, prep, *, tile_h, wt, out_dtype):
    n, hp2, wp, cin = xp.shape
    h_pad = hp2 - 2
    pch = prep["w1"].shape[1]
    cout = prep["w3"].shape[1]
    assert cin == cout, "residual add requires inplanes == planes * expansion"
    th = tile_h
    assert h_pad % th == 0
    nh = h_pad // th

    # VMEM footprint estimate (double-buffered blocks + resident weights/mask +
    # scratch); used to set an explicit limit that also fits v7x's 64 MiB.
    xsz = jnp.dtype(xp.dtype).itemsize
    csz = jnp.dtype(prep["w1"].dtype).itemsize
    osz = jnp.dtype(out_dtype).itemsize
    est = (2 * hp2 * wp * cin * xsz
           + 2 * (cin * pch + 9 * pch * pch + pch * cout) * csz
           + 2 * hp2 * wp * pch * 4
           + 2 * th * wt * cout * osz
           + (th + 2) * wp * pch * csz
           + 2 * 6 * (2 * pch + cout) * 4)
    vmem_limit = int(min(max(2 * est, 16 * 2**20), 40 * 2**20))

    kernel = functools.partial(_fused_kernel, tile_h=th)

    # TODO(synk): for very large feature maps the whole-image residency of the
    # input could be replaced by a manual halo-DMA per row tile.
    return pl.pallas_call(
        kernel,
        out_shape=jax.ShapeDtypeStruct((n, h_pad, wt, cout), out_dtype),
        grid=(n, nh),
        in_specs=[
            pl.BlockSpec((None, hp2, wp, cin), lambda i, j: (i, 0, 0, 0)),
            pl.BlockSpec((cin, pch), lambda i, j: (0, 0)),
            pl.BlockSpec((9, pch, pch), lambda i, j: (0, 0, 0)),
            pl.BlockSpec((pch, cout), lambda i, j: (0, 0)),
            pl.BlockSpec((1, pch), lambda i, j: (0, 0)),
            pl.BlockSpec((1, pch), lambda i, j: (0, 0)),
            pl.BlockSpec((1, pch), lambda i, j: (0, 0)),
            pl.BlockSpec((1, pch), lambda i, j: (0, 0)),
            pl.BlockSpec((1, cout), lambda i, j: (0, 0)),
            pl.BlockSpec((1, cout), lambda i, j: (0, 0)),
            pl.BlockSpec((hp2, wp, pch), lambda i, j: (0, 0, 0)),
        ],
        out_specs=pl.BlockSpec((None, th, wt, cout), lambda i, j: (i, j, 0, 0)),
        scratch_shapes=[pltpu.VMEM((th + 2, wp, pch), prep["w1"].dtype)],
        compiler_params=pltpu.CompilerParams(
            dimension_semantics=("parallel", "parallel"),
            vmem_limit_bytes=vmem_limit),
    )(xp, prep["w1"], prep["w2"], prep["w3"],
      prep["s1"], prep["b1"], prep["s2"], prep["b2"], prep["s3"], prep["b3"],
      mask)


# ----------------------------------------------------------------------------
# One-time parameter preparation (weight re-layout + BN fold + channel pad)
# ----------------------------------------------------------------------------
def prepare_bottleneck_params(params, compute_dtype=jnp.float32, lane=LANE):
    planes, inplanes = params["w1"].shape[:2]
    cout = params["w3"].shape[0]
    assert cout == inplanes, "no-downsample bottleneck needs inplanes == planes*4"

    cp_in = _round_up(inplanes, lane)
    pp = _round_up(planes, lane)
    cp_out = _round_up(cout, lane)

    w1 = jnp.transpose(params["w1"][:, :, 0, 0], (1, 0))                 # (Cin, P)
    w1 = _pad_axis(_pad_axis(w1, 0, cp_in), 1, pp).astype(compute_dtype)
    w2 = jnp.transpose(params["w2"], (2, 3, 1, 0)).reshape(9, planes, planes)
    w2 = _pad_axis(_pad_axis(w2, 1, pp), 2, pp).astype(compute_dtype)     # (9,P,P)
    w3 = jnp.transpose(params["w3"][:, :, 0, 0], (1, 0))                 # (P, Cout)
    w3 = _pad_axis(_pad_axis(w3, 0, pp), 1, cp_out).astype(compute_dtype)

    def fold(g, b, m, v, size):
        scale = g / jnp.sqrt(v + EPS)
        bias = b - m * scale
        scale = _pad_axis(scale, 0, size).reshape(1, size).astype(jnp.float32)
        bias = _pad_axis(bias, 0, size).reshape(1, size).astype(jnp.float32)
        return scale, bias

    s1, b1 = fold(params["g1"], params["be1"], params["m1"], params["v1"], pp)
    s2, b2 = fold(params["g2"], params["be2"], params["m2"], params["v2"], pp)
    s3, b3 = fold(params["g3"], params["be3"], params["m3"], params["v3"], cp_out)

    return dict(w1=w1, w2=w2, w3=w3, s1=s1, b1=b1, s2=s2, b2=b2, s3=s3, b3=b3)


def _border_mask(h_pad, h, wp, w, pch):
    rows = (jnp.arange(h_pad + 2) >= 1) & (jnp.arange(h_pad + 2) <= h)
    cols = (jnp.arange(wp) >= 1) & (jnp.arange(wp) <= w)
    m = (rows[:, None] & cols[None, :]).astype(jnp.float32)    # (Hp+2, Wp)
    return jnp.broadcast_to(m[:, :, None], (h_pad + 2, wp, pch))


# ----------------------------------------------------------------------------
# Forward (NCHW in / NCHW out, matching the PyTorch module)
# ----------------------------------------------------------------------------
@functools.partial(jax.jit, static_argnames=("cout_real", "tile_h"))
def bottleneck_forward(x_nchw, prep, *, cout_real, tile_h=8):
    # TODO(synk): keep the surrounding model in NHWC so these boundary
    # transposes (HBM round trips outside the Pallas pipeline) disappear.
    x = jnp.transpose(x_nchw, (0, 2, 3, 1))                     # NHWC
    n, h, w, cin = x.shape
    cp_in = prep["w1"].shape[0]
    pch = prep["w1"].shape[1]

    th = max(1, int(tile_h))
    h_pad = _round_up(h, th)                 # rows padded to a multiple of tile_h
    wt = _round_up(w, SUBLANE)               # padded output width (lane-friendly)
    wp = _round_up(wt + 2, SUBLANE)          # padded input / scratch width

    xp = jnp.pad(x, ((0, 0), (1, h_pad - h + 1), (1, wp - w - 1),
                     (0, cp_in - cin)))
    mask = _border_mask(h_pad, h, wp, w, pch)

    out = _fused_bottleneck_call(xp, mask, prep, tile_h=th, wt=wt,
                                 out_dtype=x_nchw.dtype)
    out = out[:, :h, :w, :cout_real]
    return jnp.transpose(out, (0, 3, 1, 2))                     # back to NCHW


# ----------------------------------------------------------------------------
# Pure-JAX reference (NCHW, same as the PyTorch module in eval mode)
# ----------------------------------------------------------------------------
def bottleneck_reference(x, p):
    def conv(x, w, pad):
        return lax.conv_general_dilated(
            x, w, (1, 1), [(pad, pad), (pad, pad)],
            dimension_numbers=("NCHW", "OIHW", "NCHW"))

    def bn(x, g, b, m, v):
        inv = 1.0 / jnp.sqrt(v + EPS)
        return (x - m[None, :, None, None]) * (g * inv)[None, :, None, None] \
            + b[None, :, None, None]

    out = jax.nn.relu(bn(conv(x, p["w1"], 0), p["g1"], p["be1"], p["m1"], p["v1"]))
    out = jax.nn.relu(bn(conv(out, p["w2"], 1), p["g2"], p["be2"], p["m2"], p["v2"]))
    out = bn(conv(out, p["w3"], 0), p["g3"], p["be3"], p["m3"], p["v3"])
    out = out + x                      # downsample is None, stride == 1
    return jax.nn.relu(out)


# ----------------------------------------------------------------------------
if __name__ == "__main__":
    # Small shapes: inplanes=16, planes=4, expansion=4 => output channels = 16.
    N, inplanes, H, W = 2, 16, 16, 16
    planes = 4

    key = jax.random.PRNGKey(0)
    keys = jax.random.split(key, 16)

    params = {
        "w1": 0.2 * jax.random.normal(keys[0], (planes, inplanes, 1, 1), jnp.float32),
        "w2": 0.2 * jax.random.normal(keys[1], (planes, planes, 3, 3), jnp.float32),
        "w3": 0.2 * jax.random.normal(keys[2], (planes * 4, planes, 1, 1), jnp.float32),
        # BatchNorm (eval mode): gamma, beta, running_mean, running_var.
        "g1": jax.random.uniform(keys[3], (planes,), jnp.float32, 0.5, 1.5),
        "be1": 0.1 * jax.random.normal(keys[4], (planes,), jnp.float32),
        "m1": 0.1 * jax.random.normal(keys[5], (planes,), jnp.float32),
        "v1": jax.random.uniform(keys[6], (planes,), jnp.float32, 0.5, 1.5),
        "g2": jax.random.uniform(keys[7], (planes,), jnp.float32, 0.5, 1.5),
        "be2": 0.1 * jax.random.normal(keys[8], (planes,), jnp.float32),
        "m2": 0.1 * jax.random.normal(keys[9], (planes,), jnp.float32),
        "v2": jax.random.uniform(keys[10], (planes,), jnp.float32, 0.5, 1.5),
        "g3": jax.random.uniform(keys[11], (planes * 4,), jnp.float32, 0.5, 1.5),
        "be3": 0.1 * jax.random.normal(keys[12], (planes * 4,), jnp.float32),
        "m3": 0.1 * jax.random.normal(keys[13], (planes * 4,), jnp.float32),
        "v3": jax.random.uniform(keys[14], (planes * 4,), jnp.float32, 0.5, 1.5),
    }

    x = jax.random.normal(keys[15], (N, inplanes, H, W), jnp.float32)
    ref = bottleneck_reference(x, params)

    # f32 matmul operands: tight tolerance.
    prep_f32 = prepare_bottleneck_params(params, compute_dtype=jnp.float32)
    out = bottleneck_forward(x, prep_f32, cout_real=planes * 4, tile_h=8)
    out = jax.block_until_ready(out)
    assert out.shape == (N, planes * 4, H, W)
    assert jnp.allclose(out, ref, atol=1e-4, rtol=1e-4), \
        f"f32 path: max abs err = {jnp.max(jnp.abs(out - ref))}"

    # bf16 matmul operands (v6e / v7x MXU path), f32 accumulation + epilogue.
    prep_bf16 = prepare_bottleneck_params(params, compute_dtype=jnp.bfloat16)
    out_bf16 = bottleneck_forward(x, prep_bf16, cout_real=planes * 4, tile_h=8)
    out_bf16 = jax.block_until_ready(out_bf16)
    assert jnp.allclose(out_bf16, ref, atol=1e-1, rtol=1e-1), \
        f"bf16 path: max abs err = {jnp.max(jnp.abs(out_bf16 - ref))}"

    print("KERNEL_OK")
</pallas_src>

<mosaic_0001>
module attributes {stable_mosaic.version = 11 : i64} {
  func.func @_fused_kernel(%arg0: i32, %arg1: i32, %arg2: memref<1x18x24x128xf32, #tpu.memory_space<vmem>>, %arg3: memref<128x128xf32, #tpu.memory_space<vmem>>, %arg4: memref<9x128x128xf32, #tpu.memory_space<vmem>>, %arg5: memref<128x128xf32, #tpu.memory_space<vmem>>, %arg6: memref<1x128xf32, #tpu.memory_space<vmem>>, %arg7: memref<1x128xf32, #tpu.memory_space<vmem>>, %arg8: memref<1x128xf32, #tpu.memory_space<vmem>>, %arg9: memref<1x128xf32, #tpu.memory_space<vmem>>, %arg10: memref<1x128xf32, #tpu.memory_space<vmem>>, %arg11: memref<1x128xf32, #tpu.memory_space<vmem>>, %arg12: memref<18x24x128xf32, #tpu.memory_space<vmem>>, %arg13: memref<1x8x16x128xf32, #tpu.memory_space<vmem>>, %arg14: memref<10x24x128xf32, #tpu.memory_space<vmem>>) attributes {dimension_semantics = [#tpu.dimension_semantics<parallel>, #tpu.dimension_semantics<parallel>], iteration_bounds = array<i64: 2, 2>, scalar_prefetch = 0 : i64, scratch_operands = 1 : i64, tpu.core_type = #tpu.core_type<tc>, window_params = [{transform_indices = @transform_0, window_bounds = array<i64: 1, 18, 24, 128>}, {pipeline_mode = #tpu.pipeline_mode<synchronous>, transform_indices = @transform_1, window_bounds = array<i64: 128, 128>}, {pipeline_mode = #tpu.pipeline_mode<synchronous>, transform_indices = @transform_2, window_bounds = array<i64: 9, 128, 128>}, {pipeline_mode = #tpu.pipeline_mode<synchronous>, transform_indices = @transform_3, window_bounds = array<i64: 128, 128>}, {pipeline_mode = #tpu.pipeline_mode<synchronous>, transform_indices = @transform_4, window_bounds = array<i64: 1, 128>}, {pipeline_mode = #tpu.pipeline_mode<synchronous>, transform_indices = @transform_5, window_bounds = array<i64: 1, 128>}, {pipeline_mode = #tpu.pipeline_mode<synchronous>, transform_indices = @transform_6, window_bounds = array<i64: 1, 128>}, {pipeline_mode = #tpu.pipeline_mode<synchronous>, transform_indices = @transform_7, window_bounds = array<i64: 1, 128>}, {pipeline_mode = #tpu.pipeline_mode<synchronous>, transform_indices = @transform_8, window_bounds = array<i64: 1, 128>}, {pipeline_mode = #tpu.pipeline_mode<synchronous>, transform_indices = @transform_9, window_bounds = array<i64: 1, 128>}, {pipeline_mode = #tpu.pipeline_mode<synchronous>, transform_indices = @transform_10, window_bounds = array<i64: 18, 24, 128>}, {transform_indices = @transform_11, window_bounds = array<i64: 1, 8, 16, 128>}]} {
    %c8_i32 = arith.constant 8 : i32
    %0 = arith.muli %arg1, %c8_i32 : i32
    %1 = tpu.assume_multiple %0, 8 : i32
    %c0 = arith.constant 0 : index
    %c0_0 = arith.constant 0 : index
    %2 = vector.load %arg3[%c0, %c0_0] : memref<128x128xf32, #tpu.memory_space<vmem>>, vector<128x128xf32>
    %c0_1 = arith.constant 0 : index
    %c0_2 = arith.constant 0 : index
    %3 = vector.load %arg5[%c0_1, %c0_2] : memref<128x128xf32, #tpu.memory_space<vmem>>, vector<128x128xf32>
    %c0_3 = arith.constant 0 : index
    %c0_4 = arith.constant 0 : index
    %4 = vector.load %arg6[%c0_3, %c0_4] : memref<1x128xf32, #tpu.memory_space<vmem>>, vector<1x128xf32>
    %c0_5 = arith.constant 0 : index
    %c0_6 = arith.constant 0 : index
    %5 = vector.load %arg7[%c0_5, %c0_6] : memref<1x128xf32, #tpu.memory_space<vmem>>, vector<1x128xf32>
    %c0_7 = arith.constant 0 : index
    %c0_8 = arith.constant 0 : index
    %6 = vector.load %arg8[%c0_7, %c0_8] : memref<1x128xf32, #tpu.memory_space<vmem>>, vector<1x128xf32>
    %c0_9 = arith.constant 0 : index
    %c0_10 = arith.constant 0 : index
    %7 = vector.load %arg9[%c0_9, %c0_10] : memref<1x128xf32, #tpu.memory_space<vmem>>, vector<1x128xf32>
    %c0_11 = arith.constant 0 : index
    %c0_12 = arith.constant 0 : index
    %8 = vector.load %arg10[%c0_11, %c0_12] : memref<1x128xf32, #tpu.memory_space<vmem>>, vector<1x128xf32>
    %c0_13 = arith.constant 0 : index
    %c0_14 = arith.constant 0 : index
    %9 = vector.load %arg11[%c0_13, %c0_14] : memref<1x128xf32, #tpu.memory_space<vmem>>, vector<1x128xf32>
    %c0_15 = arith.constant 0 : index
    %10 = arith.index_cast %1 : i32 to index
    %c0_16 = arith.constant 0 : index
    %c0_17 = arith.constant 0 : index
    %11 = vector.load %arg2[%c0_15, %10, %c0_16, %c0_17] : memref<1x18x24x128xf32, #tpu.memory_space<vmem>>, vector<1x10x24x128xf32>
    %12 = vector.shape_cast %11 : vector<1x10x24x128xf32> to vector<10x24x128xf32>
    %13 = vector.shape_cast %12 : vector<10x24x128xf32> to vector<240x128xf32>
    %cst = arith.constant dense<0.000000e+00> : vector<240x128xf32>
    %14 = tpu.matmul %13, %2, %cst {dimension_numbers = #tpu.dot_dimension_numbers<[1], [0], [0], [1], [0, 0, 1, 1], [], []>} : vector<240x128xf32>, vector<128x128xf32>, vector<240x128xf32> -> vector<240x128xf32>
    %15 = vector.broadcast %4 : vector<1x128xf32> to vector<240x128xf32>
    %16 = arith.mulf %14, %15 : vector<240x128xf32>
    %17 = vector.broadcast %5 : vector<1x128xf32> to vector<240x128xf32>
    %18 = arith.addf %16, %17 : vector<240x128xf32>
    %cst_18 = arith.constant 0.000000e+00 : f32
    %19 = vector.broadcast %cst_18 : f32 to vector<240x128xf32>
    %20 = arith.maximumf %18, %19 : vector<240x128xf32>
    %21 = vector.shape_cast %20 : vector<240x128xf32> to vector<10x24x128xf32>
    %22 = arith.index_cast %1 : i32 to index
    %c0_19 = arith.constant 0 : index
    %c0_20 = arith.constant 0 : index
    %23 = vector.load %arg12[%22, %c0_19, %c0_20] : memref<18x24x128xf32, #tpu.memory_space<vmem>>, vector<10x24x128xf32>
    %24 = arith.mulf %21, %23 : vector<10x24x128xf32>
    %c0_21 = arith.constant 0 : index
    %c0_22 = arith.constant 0 : index
    %c0_23 = arith.constant 0 : index
    %25 = vector.load %arg14[%c0_21, %c0_22, %c0_23] : memref<10x24x128xf32, #tpu.memory_space<vmem>>, vector<10x24x128xf32>
    tpu.vector_store %arg14[%c0_21, %c0_22, %c0_23], %24 {strides = array<i32>} : memref<10x24x128xf32, #tpu.memory_space<vmem>>, vector<10x24x128xf32>,
    %cst_24 = arith.constant 0.000000e+00 : f32
    %26 = vector.broadcast %cst_24 : f32 to vector<128x128xf32>
    %c0_25 = arith.constant 0 : index
    %c0_26 = arith.constant 0 : index
    %c0_27 = arith.constant 0 : index
    %27 = vector.load %arg14[%c0_25, %c0_26, %c0_27] : memref<10x24x128xf32, #tpu.memory_space<vmem>>, vector<8x24x128xf32>
    %28 = vector.extract_strided_slice %27 {offsets = [0, 0, 0], sizes = [8, 16, 128], strides = [1, 1, 1]} : vector<8x24x128xf32> to vector<8x16x128xf32>
    %29 = vector.shape_cast %28 : vector<8x16x128xf32> to vector<128x128xf32>
    %c0_28 = arith.constant 0 : index
    %c0_29 = arith.constant 0 : index
    %c0_30 = arith.constant 0 : index
    %30 = vector.load %arg4[%c0_28, %c0_29, %c0_30] : memref<9x128x128xf32, #tpu.memory_space<vmem>>, vector<1x128x128xf32>
    %31 = vector.shape_cast %30 : vector<1x128x128xf32> to vector<128x128xf32>
    %cst_31 = arith.constant dense<0.000000e+00> : vector<128x128xf32>
    %32 = tpu.matmul %29, %31, %cst_31 {dimension_numbers = #tpu.dot_dimension_numbers<[1], [0], [0], [1], [0, 0, 1, 1], [], []>} : vector<128x128xf32>, vector<128x128xf32>, vector<128x128xf32> -> vector<128x128xf32>
    %33 = arith.addf %26, %32 : vector<128x128xf32>
    %34 = vector.extract_strided_slice %27 {offsets = [0, 1, 0], sizes = [8, 16, 128], strides = [1, 1, 1]} : vector<8x24x128xf32> to vector<8x16x128xf32>
    %35 = vector.shape_cast %34 : vector<8x16x128xf32> to vector<128x128xf32>
    %c1 = arith.constant 1 : index
    %c0_32 = arith.constant 0 : index
    %c0_33 = arith.constant 0 : index
    %36 = vector.load %arg4[%c1, %c0_32, %c0_33] : memref<9x128x128xf32, #tpu.memory_space<vmem>>, vector<1x128x128xf32>
    %37 = vector.shape_cast %36 : vector<1x128x128xf32> to vector<128x128xf32>
    %cst_34 = arith.constant dense<0.000000e+00> : vector<128x128xf32>
    %38 = tpu.matmul %35, %37, %cst_34 {dimension_numbers = #tpu.dot_dimension_numbers<[1], [0], [0], [1], [0, 0, 1, 1], [], []>} : vector<128x128xf32>, vector<128x128xf32>, vector<128x128xf32> -> vector<128x128xf32>
    %39 = arith.addf %33, %38 : vector<128x128xf32>
    %40 = vector.extract_strided_slice %27 {offsets = [0, 2, 0], sizes = [8, 16, 128], strides = [1, 1, 1]} : vector<8x24x128xf32> to vector<8x16x128xf32>
    %41 = vector.shape_cast %40 : vector<8x16x128xf32> to vector<128x128xf32>
    %c2 = arith.constant 2 : index
    %c0_35 = arith.constant 0 : index
    %c0_36 = arith.constant 0 : index
    %42 = vector.load %arg4[%c2, %c0_35, %c0_36] : memref<9x128x128xf32, #tpu.memory_space<vmem>>, vector<1x128x128xf32>
    %43 = vector.shape_cast %42 : vector<1x128x128xf32> to vector<128x128xf32>
    %cst_37 = arith.constant dense<0.000000e+00> : vector<128x128xf32>
    %44 = tpu.matmul %41, %43, %cst_37 {dimension_numbers = #tpu.dot_dimension_numbers<[1], [0], [0], [1], [0, 0, 1, 1], [], []>} : vector<128x128xf32>, vector<128x128xf32>, vector<128x128xf32> -> vector<128x128xf32>
    %45 = arith.addf %39, %44 : vector<128x128xf32>
    %c1_38 = arith.constant 1 : index
    %c0_39 = arith.constant 0 : index
    %c0_40 = arith.constant 0 : index
    %46 = vector.load %arg14[%c1_38, %c0_39, %c0_40] : memref<10x24x128xf32, #tpu.memory_space<vmem>>, vector<8x24x128xf32>
    %47 = vector.extract_strided_slice %46 {offsets = [0, 0, 0], sizes = [8, 16, 128], strides = [1, 1, 1]} : vector<8x24x128xf32> to vector<8x16x128xf32>
    %48 = vector.shape_cast %47 : vector<8x16x128xf32> to vector<128x128xf32>
    %c3 = arith.constant 3 : index
    %c0_41 = arith.constant 0 : index
    %c0_42 = arith.constant 0 : index
    %49 = vector.load %arg4[%c3, %c0_41, %c0_42] : memref<9x128x128xf32, #tpu.memory_space<vmem>>, vector<1x128x128xf32>
    %50 = vector.shape_cast %49 : vector<1x128x128xf32> to vector<128x128xf32>
    %cst_43 = arith.constant dense<0.000000e+00> : vector<128x128xf32>
    %51 = tpu.matmul %48, %50, %cst_43 {dimension_numbers = #tpu.dot_dimension_numbers<[1], [0], [0], [1], [0, 0, 1, 1], [], []>} : vector<128x128xf32>, vector<128x128xf32>, vector<128x128xf32> -> vector<128x128xf32>
    %52 = arith.addf %45, %51 : vector<128x128xf32>
    %53 = vector.extract_strided_slice %46 {offsets = [0, 1, 0], sizes = [8, 16, 128], strides = [1, 1, 1]} : vector<8x24x128xf32> to vector<8x16x128xf32>
    %54 = vector.shape_cast %53 : vector<8x16x128xf32> to vector<128x128xf32>
    %c4 = arith.constant 4 : index
    %c0_44 = arith.constant 0 : index
    %c0_45 = arith.constant 0 : index
    %55 = vector.load %arg4[%c4, %c0_44, %c0_45] : memref<9x128x128xf32, #tpu.memory_space<vmem>>, vector<1x128x128xf32>
    %56 = vector.shape_cast %55 : vector<1x128x128xf32> to vector<128x128xf32>
    %cst_46 = arith.constant dense<0.000000e+00> : vector<128x128xf32>
    %57 = tpu.matmul %54, %56, %cst_46 {dimension_numbers = #tpu.dot_dimension_numbers<[1], [0], [0], [1], [0, 0, 1, 1], [], []>} : vector<128x128xf32>, vector<128x128xf32>, vector<128x128xf32> -> vector<128x128xf32>
    %58 = arith.addf %52, %57 : vector<128x128xf32>
    %59 = vector.extract_strided_slice %46 {offsets = [0, 2, 0], sizes = [8, 16, 128], strides = [1, 1, 1]} : vector<8x24x128xf32> to vector<8x16x128xf32>
    %60 = vector.shape_cast %59 : vector<8x16x128xf32> to vector<128x128xf32>
    %c5 = arith.constant 5 : index
    %c0_47 = arith.constant 0 : index
    %c0_48 = arith.constant 0 : index
    %61 = vector.load %arg4[%c5, %c0_47, %c0_48] : memref<9x128x128xf32, #tpu.memory_space<vmem>>, vector<1x128x128xf32>
    %62 = vector.shape_cast %61 : vector<1x128x128xf32> to vector<128x128xf32>
    %cst_49 = arith.constant dense<0.000000e+00> : vector<128x128xf32>
    %63 = tpu.matmul %60, %62, %cst_49 {dimension_numbers = #tpu.dot_dimension_numbers<[1], [0], [0], [1], [0, 0, 1, 1], [], []>} : vector<128x128xf32>, vector<128x128xf32>, vector<128x128xf32> -> vector<128x128xf32>
    %64 = arith.addf %58, %63 : vector<128x128xf32>
    %c2_50 = arith.constant 2 : index
    %c0_51 = arith.constant 0 : index
    %c0_52 = arith.constant 0 : index
    %65 = vector.load %arg14[%c2_50, %c0_51, %c0_52] : memref<10x24x128xf32, #tpu.memory_space<vmem>>, vector<8x24x128xf32>
    %66 = vector.extract_strided_slice %65 {offsets = [0, 0, 0], sizes = [8, 16, 128], strides = [1, 1, 1]} : vector<8x24x128xf32> to vector<8x16x128xf32>
    %67 = vector.shape_cast %66 : vector<8x16x128xf32> to vector<128x128xf32>
    %c6 = arith.constant 6 : index
    %c0_53 = arith.constant 0 : index
    %c0_54 = arith.constant 0 : index
    %68 = vector.load %arg4[%c6, %c0_53, %c0_54] : memref<9x128x128xf32, #tpu.memory_space<vmem>>, vector<1x128x128xf32>
    %69 = vector.shape_cast %68 : vector<1x128x128xf32> to vector<128x128xf32>
    %cst_55 = arith.constant dense<0.000000e+00> : vector<128x128xf32>
    %70 = tpu.matmul %67, %69, %cst_55 {dimension_numbers = #tpu.dot_dimension_numbers<[1], [0], [0], [1], [0, 0, 1, 1], [], []>} : vector<128x128xf32>, vector<128x128xf32>, vector<128x128xf32> -> vector<128x128xf32>
    %71 = arith.addf %64, %70 : vector<128x128xf32>
    %72 = vector.extract_strided_slice %65 {offsets = [0, 1, 0], sizes = [8, 16, 128], strides = [1, 1, 1]} : vector<8x24x128xf32> to vector<8x16x128xf32>
    %73 = vector.shape_cast %72 : vector<8x16x128xf32> to vector<128x128xf32>
    %c7 = arith.constant 7 : index
    %c0_56 = arith.constant 0 : index
    %c0_57 = arith.constant 0 : index
    %74 = vector.load %arg4[%c7, %c0_56, %c0_57] : memref<9x128x128xf32, #tpu.memory_space<vmem>>, vector<1x128x128xf32>
    %75 = vector.shape_cast %74 : vector<1x128x128xf32> to vector<128x128xf32>
    %cst_58 = arith.constant dense<0.000000e+00> : vector<128x128xf32>
    %76 = tpu.matmul %73, %75, %cst_58 {dimension_numbers = #tpu.dot_dimension_numbers<[1], [0], [0], [1], [0, 0, 1, 1], [], []>} : vector<128x128xf32>, vector<128x128xf32>, vector<128x128xf32> -> vector<128x128xf32>
    %77 = arith.addf %71, %76 : vector<128x128xf32>
    %78 = vector.extract_strided_slice %65 {offsets = [0, 2, 0], sizes = [8, 16, 128], strides = [1, 1, 1]} : vector<8x24x128xf32> to vector<8x16x128xf32>
    %79 = vector.shape_cast %78 : vector<8x16x128xf32> to vector<128x128xf32>
    %c8 = arith.constant 8 : index
    %c0_59 = arith.constant 0 : index
    %c0_60 = arith.constant 0 : index
    %80 = vector.load %arg4[%c8, %c0_59, %c0_60] : memref<9x128x128xf32, #tpu.memory_space<vmem>>, vector<1x128x128xf32>
    %81 = vector.shape_cast %80 : vector<1x128x128xf32> to vector<128x128xf32>
    %cst_61 = arith.constant dense<0.000000e+00> : vector<128x128xf32>
    %82 = tpu.matmul %79, %81, %cst_61 {dimension_numbers = #tpu.dot_dimension_numbers<[1], [0], [0], [1], [0, 0, 1, 1], [], []>} : vector<128x128xf32>, vector<128x128xf32>, vector<128x128xf32> -> vector<128x128xf32>
    %83 = arith.addf %77, %82 : vector<128x128xf32>
    %84 = vector.broadcast %6 : vector<1x128xf32> to vector<128x128xf32>
    %85 = arith.mulf %83, %84 : vector<128x128xf32>
    %86 = vector.broadcast %7 : vector<1x128xf32> to vector<128x128xf32>
    %87 = arith.addf %85, %86 : vector<128x128xf32>
    %cst_62 = arith.constant 0.000000e+00 : f32
    %88 = vector.broadcast %cst_62 : f32 to vector<128x128xf32>
    %89 = arith.maximumf %87, %88 : vector<128x128xf32>
    %cst_63 = arith.constant dense<0.000000e+00> : vector<128x128xf32>
    %90 = tpu.matmul %89, %3, %cst_63 {dimension_numbers = #tpu.dot_dimension_numbers<[1], [0], [0], [1], [0, 0, 1, 1], [], []>} : vector<128x128xf32>, vector<128x128xf32>, vector<128x128xf32> -> vector<128x128xf32>
    %c1_i32 = arith.constant 1 : i32
    %91 = arith.addi %1, %c1_i32 : i32
    %c0_64 = arith.constant 0 : index
    %92 = arith.index_cast %91 : i32 to index
    %c0_65 = arith.constant 0 : index
    %c0_66 = arith.constant 0 : index
    %93 = vector.load %arg2[%c0_64, %92, %c0_65, %c0_66] : memref<1x18x24x128xf32, #tpu.memory_space<vmem>>, vector<1x8x24x128xf32>
    %94 = vector.shape_cast %93 : vector<1x8x24x128xf32> to vector<8x24x128xf32>
    %95 = vector.extract_strided_slice %94 {offsets = [0, 1, 0], sizes = [8, 16, 128], strides = [1, 1, 1]} : vector<8x24x128xf32> to vector<8x16x128xf32>
    %96 = vector.shape_cast %95 : vector<8x16x128xf32> to vector<128x128xf32>
    %97 = vector.broadcast %8 : vector<1x128xf32> to vector<128x128xf32>
    %98 = arith.mulf %90, %97 : vector<128x128xf32>
    %99 = vector.broadcast %9 : vector<1x128xf32> to vector<128x128xf32>
    %100 = arith.addf %98, %99 : vector<128x128xf32>
    %101 = arith.addf %100, %96 : vector<128x128xf32>
    %cst_67 = arith.constant 0.000000e+00 : f32
    %102 = vector.broadcast %cst_67 : f32 to vector<128x128xf32>
    %103 = arith.maximumf %101, %102 : vector<128x128xf32>
    %104 = vector.shape_cast %103 : vector<128x128xf32> to vector<8x16x128xf32>
    %c0_68 = arith.constant 0 : index
    %c0_69 = arith.constant 0 : index
    %c0_70 = arith.constant 0 : index
    %c0_71 = arith.constant 0 : index
    %105 = vector.load %arg13[%c0_68, %c0_69, %c0_70, %c0_71] : memref<1x8x16x128xf32, #tpu.memory_space<vmem>>, vector<1x8x16x128xf32>
    %106 = vector.shape_cast %105 : vector<1x8x16x128xf32> to vector<8x16x128xf32>
    %107 = vector.shape_cast %104 : vector<8x16x128xf32> to vector<1x8x16x128xf32>
    tpu.vector_store %arg13[%c0_68, %c0_69, %c0_70, %c0_71], %107 {strides = array<i32>} : memref<1x8x16x128xf32, #tpu.memory_space<vmem>>, vector<1x8x16x128xf32>,
    return
  }
  func.func @transform_0(%arg0: i32, %arg1: i32) -> (i32, i32, i32, i32) {
    %c0_i32 = arith.constant 0 : i32
    %c0_i32_0 = arith.constant 0 : i32
    %c0_i32_1 = arith.constant 0 : i32
    %c0_i32_2 = arith.constant 0 : i32
    return %arg0, %c0_i32, %c0_i32_0, %c0_i32_1 : i32, i32, i32, i32
  }
  func.func @transform_1(%arg0: i32, %arg1: i32) -> (i32, i32) {
    %c0_i32 = arith.constant 0 : i32
    %c0_i32_0 = arith.constant 0 : i32
    %c0_i32_1 = arith.constant 0 : i32
    return %c0_i32, %c0_i32_0 : i32, i32
  }
  func.func @transform_2(%arg0: i32, %arg1: i32) -> (i32, i32, i32) {
    %c0_i32 = arith.constant 0 : i32
    %c0_i32_0 = arith.constant 0 : i32
    %c0_i32_1 = arith.constant 0 : i32
    %c0_i32_2 = arith.constant 0 : i32
    return %c0_i32, %c0_i32_0, %c0_i32_1 : i32, i32, i32
  }
  func.func @transform_3(%arg0: i32, %arg1: i32) -> (i32, i32) {
    %c0_i32 = arith.constant 0 : i32
    %c0_i32_0 = arith.constant 0 : i32
    %c0_i32_1 = arith.constant 0 : i32
    return %c0_i32, %c0_i32_0 : i32, i32
  }
  func.func @transform_4(%arg0: i32, %arg1: i32) -> (i32, i32) {
    %c0_i32 = arith.constant 0 : i32
    %c0_i32_0 = arith.constant 0 : i32
    %c0_i32_1 = arith.constant 0 : i32
    return %c0_i32, %c0_i32_0 : i32, i32
  }
  func.func @transform_5(%arg0: i32, %arg1: i32) -> (i32, i32) {
    %c0_i32 = arith.constant 0 : i32
    %c0_i32_0 = arith.constant 0 : i32
    %c0_i32_1 = arith.constant 0 : i32
    return %c0_i32, %c0_i32_0 : i32, i32
  }
  func.func @transform_6(%arg0: i32, %arg1: i32) -> (i32, i32) {
    %c0_i32 = arith.constant 0 : i32
    %c0_i32_0 = arith.constant 0 : i32
    %c0_i32_1 = arith.constant 0 : i32
    return %c0_i32, %c0_i32_0 : i32, i32
  }
  func.func @transform_7(%arg0: i32, %arg1: i32) -> (i32, i32) {
    %c0_i32 = arith.constant 0 : i32
    %c0_i32_0 = arith.constant 0 : i32
    %c0_i32_1 = arith.constant 0 : i32
    return %c0_i32, %c0_i32_0 : i32, i32
  }
  func.func @transform_8(%arg0: i32, %arg1: i32) -> (i32, i32) {
    %c0_i32 = arith.constant 0 : i32
    %c0_i32_0 = arith.constant 0 : i32
    %c0_i32_1 = arith.constant 0 : i32
    return %c0_i32, %c0_i32_0 : i32, i32
  }
  func.func @transform_9(%arg0: i32, %arg1: i32) -> (i32, i32) {
    %c0_i32 = arith.constant 0 : i32
    %c0_i32_0 = arith.constant 0 : i32
    %c0_i32_1 = arith.constant 0 : i32
    return %c0_i32, %c0_i32_0 : i32, i32
  }
  func.func @transform_10(%arg0: i32, %arg1: i32) -> (i32, i32, i32) {
    %c0_i32 = arith.constant 0 : i32
    %c0_i32_0 = arith.constant 0 : i32
    %c0_i32_1 = arith.constant 0 : i32
    %c0_i32_2 = arith.constant 0 : i32
    return %c0_i32, %c0_i32_0, %c0_i32_1 : i32, i32, i32
  }
  func.func @transform_11(%arg0: i32, %arg1: i32) -> (i32, i32, i32, i32) {
    %c0_i32 = arith.constant 0 : i32
    %c0_i32_0 = arith.constant 0 : i32
    %c0_i32_1 = arith.constant 0 : i32
    return %arg0, %arg1, %c0_i32, %c0_i32_0 : i32, i32, i32, i32
  }
}

</mosaic_0001>

<llo_original>
// kernel: bottleneck_forward.1
$region0: #{bottleneck_forward.1}
  #allocation0 [shape = 'u32[]', space=smem, size = 0x4, offset = 0x4, fixed_abs, tag = 'smem constant byte address 0x4 - core index']
  #allocation1 [shape = 'u32[72,128]{1,0:T(1,128)}', space=vmem, size = 0x9000, scoped, tag = 'internal scratch']
  #allocation2 [shape = 'f32[10,24,128]{2,1,0:T(8,128)}', space=vmem, size = 0x1e000, scoped, tag = 'scratch operand']
  %s0 = inlined_call_operand.vmem [shape: f32[2,18,24,128], index: 0, kind: input, shape index: {}]
  %s1 = inlined_call_operand.vmem [shape: f32[128,128], index: 1, kind: input, shape index: {}]
  %s2 = inlined_call_operand.vmem [shape: f32[9,128,128], index: 2, kind: input, shape index: {}]
  %s3 = inlined_call_operand.vmem [shape: f32[128,128], index: 3, kind: input, shape index: {}]
  %s4 = inlined_call_operand.vmem [shape: f32[1,128], index: 4, kind: input, shape index: {}]
  %s5 = inlined_call_operand.vmem [shape: f32[1,128], index: 5, kind: input, shape index: {}]
  %s6 = inlined_call_operand.vmem [shape: f32[1,128], index: 6, kind: input, shape index: {}]
  %s7 = inlined_call_operand.vmem [shape: f32[1,128], index: 7, kind: input, shape index: {}]
  %s8 = inlined_call_operand.vmem [shape: f32[1,128], index: 8, kind: input, shape index: {}]
  %s9 = inlined_call_operand.vmem [shape: f32[1,128], index: 9, kind: input, shape index: {}]
  %s10 = inlined_call_operand.vmem [shape: f32[18,24,128], index: 10, kind: input, shape index: {}]
  %s11 = inlined_call_operand.vmem [shape: f32[2,16,16,128], index: 11, kind: output, shape index: {}]
  %s12 = sld [smem:[#allocation0]]
  $region77: #{bottleneck_forward.1} parent=0
    _
  %s14 = ssub.s32 1, %s12
  %s15 = scalar_select 0, %s14, %s12
  loop: start=0, step=1, limit=6
  $region2: #{bottleneck_forward.1} parent=0 // loop_pre_header
    _
  $region3: #{bottleneck_forward.1} parent=0 // loop_header
    %s17 = sphi 0, %s21
    %p18 = scmp.ge.s32.totalorder %s17, 6
    %s24 = sphi 0, %s36
    %s25 = sphi 0, %s32
    %s26 = sphi 0, %s24
    %s27 = sphi 0, %s25
    %s28 = sphi 0, %s26
    %s29 = sphi 0, %s27
    %s39 = sphi 0, %s41
    %s42 = sphi 0, %s39
    %s43 = sphi 0, %s42
    %s59 = sphi 0, %s43
    %s63 = sphi 0, %s63
    %s65 = sphi 0, %s63
    %s66 = sphi 0, %s65
    %s80 = sphi 0, %s66
    %s84 = sphi 0, %s84
    %s86 = sphi 0, %s84
    %s87 = sphi 0, %s86
    %s101 = sphi 0, %s87
    %s105 = sphi 0, %s105
    %s107 = sphi 0, %s105
    %s108 = sphi 0, %s107
    %s122 = sphi 0, %s108
    %s126 = sphi 0, %s126
    %s128 = sphi 0, %s126
    %s129 = sphi 0, %s128
    %s143 = sphi 0, %s129
    %s147 = sphi 0, %s147
    %s149 = sphi 0, %s147
    %s150 = sphi 0, %s149
    %s164 = sphi 0, %s150
    %s168 = sphi 0, %s168
    %s170 = sphi 0, %s168
    %s171 = sphi 0, %s170
    %s185 = sphi 0, %s171
    %s189 = sphi 0, %s189
    %s191 = sphi 0, %s189
    %s192 = sphi 0, %s191
    %s206 = sphi 0, %s192
    %s210 = sphi 0, %s210
    %s212 = sphi 0, %s210
    %s213 = sphi 0, %s212
    %s227 = sphi 0, %s213
    %s231 = sphi 0, %s231
    %s233 = sphi 0, %s231
    %s234 = sphi 0, %s233
    %s248 = sphi 0, %s234
    %s252 = sphi 0, %s252
    %s254 = sphi 0, %s252
    %s255 = sphi 0, %s254
    %s269 = sphi 0, %s255
    %s277 = sphi 0, %s279
    %s280 = sphi 0, %s277
    %s281 = sphi 0, %s280
    %s297 = sphi 0, %s281
  $region4: #{bottleneck_forward.1} parent=0 // loop_header_branch
    %20 = sbr.rel (%p18) target = $region8
  $region5: #{bottleneck_forward.1} parent=0 // loop_body
    %s22 = ssub.s32 %s17, 1
    %s23 = ssub.s32 %s17, 2
    %s30 = sadd.s32 1, %s25
    %p31 = scmp.ge.s32.totalorder %s30, 2
    %s32 = scalar_select %p31, 0, %s30
    %s33 = sadd.s32 1, %s24
    %s34 = scalar_select %p31, %s33, %s24
    %p35 = scmp.ge.s32.totalorder %s34, 2
    %s36 = scalar_select %p35, 0, %s34
    %s37 = ssub.s32 %s24, %s36
    %p38 = scmp.eq.s32.totalorder %s37, 0
    %s40 = sadd.s32 %s39, 1
    %s41 = scalar_select %p38, %s39, %s40
    %p44 = pneg %p38
    %p45 = scmp.eq.s32.totalorder %s17, 3
    %p46 = por %p44, %p45
    %p47 = scmp.ne.s32.totalorder %s39, %s42
    %p48 = scmp.eq.s32.totalorder %s17, 0
    %p49 = por %p47, %p48
    %p50 = scmp.ne.s32.totalorder %s39, %s42
    %p51 = scmp.eq.s32.totalorder %s22, 3
    %p52 = por %p50, %p51
    %p53 = scmp.ne.s32.totalorder %s42, %s43
    %p54 = scmp.eq.s32.totalorder %s22, 0
    %p55 = por %p53, %p54
    %p56 = scmp.ne.s32.totalorder %s42, %s43
    %p57 = scmp.eq.s32.totalorder %s23, 3
    %p58 = por %p56, %p57
    %p60 = scmp.ne.s32.totalorder %s43, %s59
    %p61 = scmp.eq.s32.totalorder %s23, 0
    %p62 = por %p60, %p61
    %s64 = sadd.s32 %s63, 1
    %p67 = scmp.eq.s32.totalorder %s17, 3
    %p68 = scmp.ne.s32.totalorder %s63, %s65
    %p69 = scmp.eq.s32.totalorder %s17, 0
    %p70 = por %p68, %p69
    %p71 = scmp.ne.s32.totalorder %s63, %s65
    %p72 = scmp.eq.s32.totalorder %s22, 3
    %p73 = por %p71, %p72
    %p74 = scmp.ne.s32.totalorder %s65, %s66
    %p75 = scmp.eq.s32.totalorder %s22, 0
    %p76 = por %p74, %p75
    %p77 = scmp.ne.s32.totalorder %s65, %s66
    %p78 = scmp.eq.s32.totalorder %s23, 3
    %p79 = por %p77, %p78
    %p81 = scmp.ne.s32.totalorder %s66, %s80
    %p82 = scmp.eq.s32.totalorder %s23, 0
    %p83 = por %p81, %p82
    %s85 = sadd.s32 %s84, 1
    %p88 = scmp.eq.s32.totalorder %s17, 3
    %p89 = scmp.ne.s32.totalorder %s84, %s86
    %p90 = scmp.eq.s32.totalorder %s17, 0
    %p91 = por %p89, %p90
    %p92 = scmp.ne.s32.totalorder %s84, %s86
    %p93 = scmp.eq.s32.totalorder %s22, 3
    %p94 = por %p92, %p93
    %p95 = scmp.ne.s32.totalorder %s86, %s87
    %p96 = scmp.eq.s32.totalorder %s22, 0
    %p97 = por %p95, %p96
    %p98 = scmp.ne.s32.totalorder %s86, %s87
    %p99 = scmp.eq.s32.totalorder %s23, 3
    %p100 = por %p98, %p99
    %p102 = scmp.ne.s32.totalorder %s87, %s101
    %p103 = scmp.eq.s32.totalorder %s23, 0
    %p104 = por %p102, %p103
    %s106 = sadd.s32 %s105, 1
    %p109 = scmp.eq.s32.totalorder %s17, 3
    %p110 = scmp.ne.s32.totalorder %s105, %s107
    %p111 = scmp.eq.s32.totalorder %s17, 0
    %p112 = por %p110, %p111
    %p113 = scmp.ne.s32.totalorder %s105, %s107
    %p114 = scmp.eq.s32.totalorder %s22, 3
    %p115 = por %p113, %p114
    %p116 = scmp.ne.s32.totalorder %s107, %s108
    %p117 = scmp.eq.s32.totalorder %s22, 0
    %p118 = por %p116, %p117
    %p119 = scmp.ne.s32.totalorder %s107, %s108
    %p120 = scmp.eq.s32.totalorder %s23, 3
    %p121 = por %p119, %p120
    %p123 = scmp.ne.s32.totalorder %s108, %s122
    %p124 = scmp.eq.s32.totalorder %s23, 0
    %p125 = por %p123, %p124
    %s127 = sadd.s32 %s126, 1
    %p130 = scmp.eq.s32.totalorder %s17, 3
    %p131 = scmp.ne.s32.totalorder %s126, %s128
    %p132 = scmp.eq.s32.totalorder %s17, 0
    %p133 = por %p131, %p132
    %p134 = scmp.ne.s32.totalorder %s126, %s128
    %p135 = scmp.eq.s32.totalorder %s22, 3
    %p136 = por %p134, %p135
    %p137 = scmp.ne.s32.totalorder %s128, %s129
    %p138 = scmp.eq.s32.totalorder %s22, 0
    %p139 = por %p137, %p138
    %p140 = scmp.ne.s32.totalorder %s128, %s129
    %p141 = scmp.eq.s32.totalorder %s23, 3
    %p142 = por %p140, %p141
    %p144 = scmp.ne.s32.totalorder %s129, %s143
    %p145 = scmp.eq.s32.totalorder %s23, 0
    %p146 = por %p144, %p145
    %s148 = sadd.s32 %s147, 1
    %p151 = scmp.eq.s32.totalorder %s17, 3
    %p152 = scmp.ne.s32.totalorder %s147, %s149
    %p153 = scmp.eq.s32.totalorder %s17, 0
    %p154 = por %p152, %p153
    %p155 = scmp.ne.s32.totalorder %s147, %s149
    %p156 = scmp.eq.s32.totalorder %s22, 3
    %p157 = por %p155, %p156
    %p158 = scmp.ne.s32.totalorder %s149, %s150
    %p159 = scmp.eq.s32.totalorder %s22, 0
    %p160 = por %p158, %p159
    %p161 = scmp.ne.s32.totalorder %s149, %s150
    %p162 = scmp.eq.s32.totalorder %s23, 3
    %p163 = por %p161, %p162
    %p165 = scmp.ne.s32.totalorder %s150, %s164
    %p166 = scmp.eq.s32.totalorder %s23, 0
    %p167 = por %p165, %p166
    %s169 = sadd.s32 %s168, 1
    %p172 = scmp.eq.s32.totalorder %s17, 3
    %p173 = scmp.ne.s32.totalorder %s168, %s170
    %p174 = scmp.eq.s32.totalorder %s17, 0
    %p175 = por %p173, %p174
    %p176 = scmp.ne.s32.totalorder %s168, %s170
    %p177 = scmp.eq.s32.totalorder %s22, 3
    %p178 = por %p176, %p177
    %p179 = scmp.ne.s32.totalorder %s170, %s171
    %p180 = scmp.eq.s32.totalorder %s22, 0
    %p181 = por %p179, %p180
    %p182 = scmp.ne.s32.totalorder %s170, %s171
    %p183 = scmp.eq.s32.totalorder %s23, 3
    %p184 = por %p182, %p183
    %p186 = scmp.ne.s32.totalorder %s171, %s185
    %p187 = scmp.eq.s32.totalorder %s23, 0
    %p188 = por %p186, %p187
    %s190 = sadd.s32 %s189, 1
    %p193 = scmp.eq.s32.totalorder %s17, 3
    %p194 = scmp.ne.s32.totalorder %s189, %s191
    %p195 = scmp.eq.s32.totalorder %s17, 0
    %p196 = por %p194, %p195
    %p197 = scmp.ne.s32.totalorder %s189, %s191
    %p198 = scmp.eq.s32.totalorder %s22, 3
    %p199 = por %p197, %p198
    %p200 = scmp.ne.s32.totalorder %s191, %s192
    %p201 = scmp.eq.s32.totalorder %s22, 0
    %p202 = por %p200, %p201
    %p203 = scmp.ne.s32.totalorder %s191, %s192
    %p204 = scmp.eq.s32.totalorder %s23, 3
    %p205 = por %p203, %p204
    %p207 = scmp.ne.s32.totalorder %s192, %s206
    %p208 = scmp.eq.s32.totalorder %s23, 0
    %p209 = por %p207, %p208
    %s211 = sadd.s32 %s210, 1
    %p214 = scmp.eq.s32.totalorder %s17, 3
    %p215 = scmp.ne.s32.totalorder %s210, %s212
    %p216 = scmp.eq.s32.totalorder %s17, 0
    %p217 = por %p215, %p216
    %p218 = scmp.ne.s32.totalorder %s210, %s212
    %p219 = scmp.eq.s32.totalorder %s22, 3
    %p220 = por %p218, %p219
    %p221 = scmp.ne.s32.totalorder %s212, %s213
    %p222 = scmp.eq.s32.totalorder %s22, 0
    %p223 = por %p221, %p222
    %p224 = scmp.ne.s32.totalorder %s212, %s213
    %p225 = scmp.eq.s32.totalorder %s23, 3
    %p226 = por %p224, %p225
    %p228 = scmp.ne.s32.totalorder %s213, %s227
    %p229 = scmp.eq.s32.totalorder %s23, 0
    %p230 = por %p228, %p229
    %s232 = sadd.s32 %s231, 1
    %p235 = scmp.eq.s32.totalorder %s17, 3
    %p236 = scmp.ne.s32.totalorder %s231, %s233
    %p237 = scmp.eq.s32.totalorder %s17, 0
    %p238 = por %p236, %p237
    %p239 = scmp.ne.s32.totalorder %s231, %s233
    %p240 = scmp.eq.s32.totalorder %s22, 3
    %p241 = por %p239, %p240
    %p242 = scmp.ne.s32.totalorder %s233, %s234
    %p243 = scmp.eq.s32.totalorder %s22, 0
    %p244 = por %p242, %p243
    %p245 = scmp.ne.s32.totalorder %s233, %s234
    %p246 = scmp.eq.s32.totalorder %s23, 3
    %p247 = por %p245, %p246
    %p249 = scmp.ne.s32.totalorder %s234, %s248
    %p250 = scmp.eq.s32.totalorder %s23, 0
    %p251 = por %p249, %p250
    %s253 = sadd.s32 %s252, 1
    %p256 = scmp.eq.s32.totalorder %s17, 3
    %p257 = scmp.ne.s32.totalorder %s252, %s254
    %p258 = scmp.eq.s32.totalorder %s17, 0
    %p259 = por %p257, %p258
    %p260 = scmp.ne.s32.totalorder %s252, %s254
    %p261 = scmp.eq.s32.totalorder %s22, 3
    %p262 = por %p260, %p261
    %p263 = scmp.ne.s32.totalorder %s254, %s255
    %p264 = scmp.eq.s32.totalorder %s22, 0
    %p265 = por %p263, %p264
    %p266 = scmp.ne.s32.totalorder %s254, %s255
    %p267 = scmp.eq.s32.totalorder %s23, 3
    %p268 = por %p266, %p267
    %p270 = scmp.ne.s32.totalorder %s255, %s269
    %p271 = scmp.eq.s32.totalorder %s23, 0
    %p272 = por %p270, %p271
    %s273 = ssub.s32 %s24, %s36
    %s274 = ssub.s32 %s25, %s32
    %s275 = sor.u32 %s273, %s274
    %p276 = scmp.eq.s32.totalorder %s275, 0
    %s278 = sadd.s32 %s277, 1
    %s279 = scalar_select %p276, %s277, %s278
    %p282 = pneg %p276
    %p283 = scmp.eq.s32.totalorder %s17, 3
    %p284 = por %p282, %p283
    %p285 = scmp.ne.s32.totalorder %s277, %s280
    %p286 = scmp.eq.s32.totalorder %s17, 0
    %p287 = por %p285, %p286
    %p288 = scmp.ne.s32.totalorder %s277, %s280
    %p289 = scmp.eq.s32.totalorder %s22, 3
    %p290 = por %p288, %p289
    %p291 = scmp.ne.s32.totalorder %s280, %s281
    %p292 = scmp.eq.s32.totalorder %s22, 0
    %p293 = por %p291, %p292
    %p294 = scmp.ne.s32.totalorder %s280, %s281
    %p295 = scmp.eq.s32.totalorder %s23, 3
    %p296 = por %p294, %p295
    %p298 = scmp.ne.s32.totalorder %s281, %s297
    %p299 = scmp.eq.s32.totalorder %s23, 0
    %p300 = por %p298, %p299
    %p301 = scmp.le.s32.totalorder 1, %s17
    %p302 = scmp.lt.s32.totalorder %s17, 5
    %p303 = pnand %p301, %p302
    %p304 = pneg %p303
    // Predicated region
    $region9: #{bottleneck_forward.1} parent=5 // pred_check
      _
    $region10: #{bottleneck_forward.1} parent=5 // pred_check_branch
      %306 = sbr.rel (%p303) target = $region12
    $region11: #{bottleneck_forward.1} parent=5 // pred_region
      %s307 = ssub.s32 %s17, 1
      // Predicated region
      $region13: #{bottleneck_forward.1} parent=11 // pred_check
        %p308 = pneg %p76
      $region14: #{bottleneck_forward.1} parent=11 // pred_check_branch
        %310 = sbr.rel (%p308) target = $region16
      $region15: #{bottleneck_forward.1} parent=11 // pred_region
        _
      $region16: #{bottleneck_forward.1} parent=11 // pred_fallthru
        _
      // Predicated region
      $region17: #{bottleneck_forward.1} parent=11 // pred_check
        %p311 = pneg %p97
      $region18: #{bottleneck_forward.1} parent=11 // pred_check_branch
        %313 = sbr.rel (%p311) target = $region20
      $region19: #{bottleneck_forward.1} parent=11 // pred_region
        _
      $region20: #{bottleneck_forward.1} parent=11 // pred_fallthru
        _
      // Predicated region
      $region21: #{bottleneck_forward.1} parent=11 // pred_check
        %p314 = pneg %p118
      $region22: #{bottleneck_forward.1} parent=11 // pred_check_branch
        %316 = sbr.rel (%p314) target = $region24
      $region23: #{bottleneck_forward.1} parent=11 // pred_region
        _
      $region24: #{bottleneck_forward.1} parent=11 // pred_fallthru
        _
      // Predicated region
      $region25: #{bottleneck_forward.1} parent=11 // pred_check
        %p317 = pneg %p139
      $region26: #{bottleneck_forward.1} parent=11 // pred_check_branch
        %319 = sbr.rel (%p317) target = $region28
      $region27: #{bottleneck_forward.1} parent=11 // pred_region
        _
      $region28: #{bottleneck_forward.1} parent=11 // pred_fallthru
        _
      // Predicated region
      $region29: #{bottleneck_forward.1} parent=11 // pred_check
        %p320 = pneg %p160
      $region30: #{bottleneck_forward.1} parent=11 // pred_check_branch
        %322 = sbr.rel (%p320) target = $region32
      $region31: #{bottleneck_forward.1} parent=11 // pred_region
        _
      $region32: #{bottleneck_forward.1} parent=11 // pred_fallthru
        _
      // Predicated region
      $region33: #{bottleneck_forward.1} parent=11 // pred_check
        %p323 = pneg %p181
      $region34: #{bottleneck_forward.1} parent=11 // pred_check_branch
        %325 = sbr.rel (%p323) target = $region36
      $region35: #{bottleneck_forward.1} parent=11 // pred_region
        _
      $region36: #{bottleneck_forward.1} parent=11 // pred_fallthru
        _
      // Predicated region
      $region37: #{bottleneck_forward.1} parent=11 // pred_check
        %p326 = pneg %p202
      $region38: #{bottleneck_forward.1} parent=11 // pred_check_branch
        %328 = sbr.rel (%p326) target = $region40
      $region39: #{bottleneck_forward.1} parent=11 // pred_region
        _
      $region40: #{bottleneck_forward.1} parent=11 // pred_fallthru
        _
      // Predicated region
      $region41: #{bottleneck_forward.1} parent=11 // pred_check
        %p329 = pneg %p223
      $region42: #{bottleneck_forward.1} parent=11 // pred_check_branch
        %331 = sbr.rel (%p329) target = $region44
      $region43: #{bottleneck_forward.1} parent=11 // pred_region
        _
      $region44: #{bottleneck_forward.1} parent=11 // pred_fallthru
        _
      // Predicated region
      $region45: #{bottleneck_forward.1} parent=11 // pred_check
        %p332 = pneg %p244
      $region46: #{bottleneck_forward.1} parent=11 // pred_check_branch
        %334 = sbr.rel (%p332) target = $region48
      $region47: #{bottleneck_forward.1} parent=11 // pred_region
        _
      $region48: #{bottleneck_forward.1} parent=11 // pred_fallthru
        _
      // Predicated region
      $region49: #{bottleneck_forward.1} parent=11 // pred_check
        %p335 = pneg %p265
      $region50: #{bottleneck_forward.1} parent=11 // pred_check_branch
        %337 = sbr.rel (%p335) target = $region52
      $region51: #{bottleneck_forward.1} parent=11 // pred_region
        _
      $region52: #{bottleneck_forward.1} parent=11 // pred_fallthru
        _
    $region12: #{bottleneck_forward.1} parent=5 // pred_fallthru
      _
    %p338 = scmp.lt.s32.totalorder %s17, 4
    // Predicated region
    $region53: #{bottleneck_forward.1} parent=5 // pred_check
      %p339 = pneg %p338
    $region54: #{bottleneck_forward.1} parent=5 // pred_check_branch
      %341 = sbr.rel (%p339) target = $region56
    $region55: #{bottleneck_forward.1} parent=5 // pred_region
      // Predicated region
      $region57: #{bottleneck_forward.1} parent=55 // pred_check
        %p342 = pneg %p49
      $region58: #{bottleneck_forward.1} parent=55 // pred_check_branch
        %344 = sbr.rel (%p342) target = $region60
      $region59: #{bottleneck_forward.1} parent=55 // pred_region
        %p345 = scmp.lt.s32.totalorder %s24, 1
        %s346 = scalar_select %p345, %s24, 1
        %s347 = smul.addr %s346, 54
        %s348 = smul.addr %s347, 8
        %s349 = scalar_lea.vmem %s0, %s348
      $region60: #{bottleneck_forward.1} parent=55 // pred_fallthru
        _
    $region56: #{bottleneck_forward.1} parent=5 // pred_fallthru
      _
    %p350 = scmp.le.s32.totalorder 1, %s17
    %p351 = scmp.lt.s32.totalorder %s17, 5
    %p352 = pnand %p350, %p351
    %p353 = pneg %p352
    // Predicated region
    $region61: #{bottleneck_forward.1} parent=5 // pred_check
      _
    $region62: #{bottleneck_forward.1} parent=5 // pred_check_branch
      %355 = sbr.rel (%p352) target = $region64
    $region63: #{bottleneck_forward.1} parent=5 // pred_region
      %s356 = ssub.s32 %s17, 1
      %p357 = scmp.lt.s32.totalorder %s26, 1
      %s358 = scalar_select %p357, %s26, 1
      %s359 = smul.addr %s358, 54
      %s360 = smul.addr %s359, 8
      %s361 = scalar_lea.vmem %s0, %s360
      %p362 = pneg %p55
      %p363 = pneg %p52
      %p364 = pneg %p76
      %p365 = pneg %p73
      %p366 = pneg %p97
      %p367 = pneg %p94
      %p368 = pneg %p118
      %p369 = pneg %p115
      %p370 = pneg %p139
      %p371 = pneg %p136
      %p372 = pneg %p160
      %p373 = pneg %p157
      %p374 = pneg %p181
      %p375 = pneg %p178
      %p376 = pneg %p202
      %p377 = pneg %p199
      %p378 = pneg %p223
      %p379 = pneg %p220
      %p380 = pneg %p244
      %p381 = pneg %p241
      %p382 = pneg %p265
      %p383 = pneg %p262
      %p384 = pneg %p293
      %p385 = pneg %p290
      %s386 = smul.u32 8, %s27
      %p387 = scmp.lt.s32.totalorder %s26, 1
      %s388 = scalar_select %p387, %s26, 1
      %p389 = scmp.lt.s32.totalorder %s386, 15
      %s390 = scalar_select %p389, %s386, 15
      %s391 = smul.addr %s390, 2
      %s392 = smul.addr %s388, 32
      %s393 = sadd.s32 %s391, %s392
      %s394 = smul.addr %s393, 8
      %s395 = scalar_lea.vmem %s11, %s394
      %p396 = scmp.lt.s32.totalorder %s26, 1
      %s397 = scalar_select %p396, %s26, 1
      %s398 = smul.addr %s397, 54
      %s399 = smul.addr %s398, 8
      %s400 = scalar_lea.vmem %s0, %s399
      %s401 = smul.u32 8, %s27
      %p402 = scmp.lt.s32.totalorder %s26, 1
      %s403 = scalar_select %p402, %s26, 1
      %p404 = scmp.lt.s32.totalorder %s401, 15
      %s405 = scalar_select %p404, %s401, 15
      %s406 = smul.addr %s405, 2
      %s407 = smul.addr %s403, 32
      %s408 = sadd.s32 %s406, %s407
      %s409 = smul.addr %s408, 8
      %s410 = scalar_lea.vmem %s11, %s409
      %s411 = smul.u32 8, %s27
      %s412 = smul.u32 %s27, 8
      %v413 = vld [vmem:[%s1] sm:$0xff]
      %v414 = vld [vmem:[%s1 + $0x8] sm:$0xff]
      %v415 = vld [vmem:[%s1 + $0x10] sm:$0xff]
      %v416 = vld [vmem:[%s1 + $0x18] sm:$0xff]
      %v417 = vld [vmem:[%s1 + $0x20] sm:$0xff]
      %v418 = vld [vmem:[%s1 + $0x28] sm:$0xff]
      %v419 = vld [vmem:[%s1 + $0x30] sm:$0xff]
      %v420 = vld [vmem:[%s1 + $0x38] sm:$0xff]
      %v421 = vld [vmem:[%s1 + $0x40] sm:$0xff]
      %v422 = vld [vmem:[%s1 + $0x48] sm:$0xff]
      %v423 = vld [vmem:[%s1 + $0x50] sm:$0xff]
      %v424 = vld [vmem:[%s1 + $0x58] sm:$0xff]
      %v425 = vld [vmem:[%s1 + $0x60] sm:$0xff]
      %v426 = vld [vmem:[%s1 + $0x68] sm:$0xff]
      %v427 = vld [vmem:[%s1 + $0x70] sm:$0xff]
      %v428 = vld [vmem:[%s1 + $0x78] sm:$0xff]
      %v429 = vld [vmem:[%s3] sm:$0xff]
      %v430 = vld [vmem:[%s3 + $0x8] sm:$0xff]
      %v431 = vld [vmem:[%s3 + $0x10] sm:$0xff]
      %v432 = vld [vmem:[%s3 + $0x18] sm:$0xff]
      %v433 = vld [vmem:[%s3 + $0x20] sm:$0xff]
      %v434 = vld [vmem:[%s3 + $0x28] sm:$0xff]
      %v435 = vld [vmem:[%s3 + $0x30] sm:$0xff]
      %v436 = vld [vmem:[%s3 + $0x38] sm:$0xff]
      %v437 = vld [vmem:[%s3 + $0x40] sm:$0xff]
      %v438 = vld [vmem:[%s3 + $0x48] sm:$0xff]
      %v439 = vld [vmem:[%s3 + $0x50] sm:$0xff]
      %v440 = vld [vmem:[%s3 + $0x58] sm:$0xff]
      %v441 = vld [vmem:[%s3 + $0x60] sm:$0xff]
      %v442 = vld [vmem:[%s3 + $0x68] sm:$0xff]
      %v443 = vld [vmem:[%s3 + $0x70] sm:$0xff]
      %v444 = vld [vmem:[%s3 + $0x78] sm:$0xff]
      %v445 = vld [vmem:[%s4] sm:$0x1]
      %v446 = vld [vmem:[%s5] sm:$0x1]
      %v447 = vld [vmem:[%s6] sm:$0x1]
      %v448 = vld [vmem:[%s7] sm:$0x1]
      %v449 = vld [vmem:[%s8] sm:$0x1]
      %v450 = vld [vmem:[%s9] sm:$0x1]
      %s451 = smul.u32 %s412, 24
      %s452 = scalar_lea.vmem %s400, %s451
      %v453 = vld [vmem:[%s452] sm:$0xff]
      %v454 = vld [vmem:[%s452 + $0x8] sm:$0xff]
      %v455 = vld [vmem:[%s452 + $0x10] sm:$0xff]
      %v456 = vld [vmem:[%s452 + $0x18] sm:$0xff]
      %v457 = vld [vmem:[%s452 + $0x20] sm:$0xff]
      %v458 = vld [vmem:[%s452 + $0x28] sm:$0xff]
      %v459 = vld [vmem:[%s452 + $0x30] sm:$0xff]
      %v460 = vld [vmem:[%s452 + $0x38] sm:$0xff]
      %v461 = vld [vmem:[%s452 + $0x40] sm:$0xff]
      %v462 = vld [vmem:[%s452 + $0x48] sm:$0xff]
      %v463 = vld [vmem:[%s452 + $0x50] sm:$0xff]
      %v464 = vld [vmem:[%s452 + $0x58] sm:$0xff]
      %v465 = vld [vmem:[%s452 + $0x60] sm:$0xff]
      %v466 = vld [vmem:[%s452 + $0x68] sm:$0xff]
      %v467 = vld [vmem:[%s452 + $0x70] sm:$0xff]
      %v468 = vld [vmem:[%s452 + $0x78] sm:$0xff]
      %v469 = vld [vmem:[%s452 + $0x80] sm:$0xff]
      %v470 = vld [vmem:[%s452 + $0x88] sm:$0xff]
      %v471 = vld [vmem:[%s452 + $0x90] sm:$0xff]
      %v472 = vld [vmem:[%s452 + $0x98] sm:$0xff]
      %v473 = vld [vmem:[%s452 + $0xa0] sm:$0xff]
      %v474 = vld [vmem:[%s452 + $0xa8] sm:$0xff]
      %v475 = vld [vmem:[%s452 + $0xb0] sm:$0xff]
      %v476 = vld [vmem:[%s452 + $0xb8] sm:$0xff]
      %v477 = vld [vmem:[%s452 + $0xc0] sm:$0xff]
      %v478 = vld [vmem:[%s452 + $0xc8] sm:$0xff]
      %v479 = vld [vmem:[%s452 + $0xd0] sm:$0xff]
      %v480 = vld [vmem:[%s452 + $0xd8] sm:$0xff]
      %v481 = vld [vmem:[%s452 + $0xe0] sm:$0xff]
      %v482 = vld [vmem:[%s452 + $0xe8] sm:$0xff]
      %483 = vmatpush.msra.mxu0 %v428
      %484 = vmatpush.msra.mxu0 %v427
      %485 = vmatpush.msra.mxu0 %v426
      %486 = vmatpush.msra.mxu0 %v425
      %487 = vmatpush.msra.mxu0 %v424
      %488 = vmatpush.msra.mxu0 %v423
      %489 = vmatpush.msra.mxu0 %v422
      %490 = vmatpush.msra.mxu0 %v421
      %491 = vmatpush.msra.mxu0 %v420
      %492 = vmatpush.msra.mxu0 %v419
      %493 = vmatpush.msra.mxu0 %v418
      %494 = vmatpush.msra.mxu0 %v417
      %495 = vmatpush.msra.mxu0 %v416
      %496 = vmatpush.msra.mxu0 %v415
      %497 = vmatpush.msra.mxu0 %v414
      %498 = vmatpush.msra.mxu0 %v413
      %499 = vmatmul.f32.gmra.mxu0 %v453
      %v500 = vpop.f32.mrf.mxu0
      %v501 = vadd.f32 0.0, %v500
      %502 = vmatmul.f32.gmra.mxu0 %v454
      %v503 = vpop.f32.mrf.mxu0
      %v504 = vadd.f32 0.0, %v503
      %505 = vmatmul.f32.gmra.mxu0 %v455
      %v506 = vpop.f32.mrf.mxu0
      %v507 = vadd.f32 0.0, %v506
      %508 = vmatmul.f32.gmra.mxu0 %v456
      %v509 = vpop.f32.mrf.mxu0
      %v510 = vadd.f32 0.0, %v509
      %511 = vmatmul.f32.gmra.mxu0 %v457
      %v512 = vpop.f32.mrf.mxu0
      %v513 = vadd.f32 0.0, %v512
      %514 = vmatmul.f32.gmra.mxu0 %v458
      %v515 = vpop.f32.mrf.mxu0
      %v516 = vadd.f32 0.0, %v515
      %517 = vmatmul.f32.gmra.mxu0 %v459
      %v518 = vpop.f32.mrf.mxu0
      %v519 = vadd.f32 0.0, %v518
      %520 = vmatmul.f32.gmra.mxu0 %v460
      %v521 = vpop.f32.mrf.mxu0
      %v522 = vadd.f32 0.0, %v521
      %523 = vmatmul.f32.gmra.mxu0 %v461
      %v524 = vpop.f32.mrf.mxu0
      %v525 = vadd.f32 0.0, %v524
      %526 = vmatmul.f32.gmra.mxu0 %v462
      %v527 = vpop.f32.mrf.mxu0
      %v528 = vadd.f32 0.0, %v527
      %529 = vmatmul.f32.gmra.mxu0 %v463
      %v530 = vpop.f32.mrf.mxu0
      %v531 = vadd.f32 0.0, %v530
      %532 = vmatmul.f32.gmra.mxu0 %v464
      %v533 = vpop.f32.mrf.mxu0
      %v534 = vadd.f32 0.0, %v533
      %535 = vmatmul.f32.gmra.mxu0 %v465
      %v536 = vpop.f32.mrf.mxu0
      %v537 = vadd.f32 0.0, %v536
      %538 = vmatmul.f32.gmra.mxu0 %v466
      %v539 = vpop.f32.mrf.mxu0
      %v540 = vadd.f32 0.0, %v539
      %541 = vmatmul.f32.gmra.mxu0 %v467
      %v542 = vpop.f32.mrf.mxu0
      %v543 = vadd.f32 0.0, %v542
      %544 = vmatmul.f32.gmra.mxu0 %v468
      %v545 = vpop.f32.mrf.mxu0
      %v546 = vadd.f32 0.0, %v545
      %547 = vmatmul.f32.gmra.mxu0 %v469
      %v548 = vpop.f32.mrf.mxu0
      %v549 = vadd.f32 0.0, %v548
      %550 = vmatmul.f32.gmra.mxu0 %v470
      %v551 = vpop.f32.mrf.mxu0
      %v552 = vadd.f32 0.0, %v551
      %553 = vmatmul.f32.gmra.mxu0 %v471
      %v554 = vpop.f32.mrf.mxu0
      %v555 = vadd.f32 0.0, %v554
      %556 = vmatmul.f32.gmra.mxu0 %v472
      %v557 = vpop.f32.mrf.mxu0
      %v558 = vadd.f32 0.0, %v557
      %559 = vmatmul.f32.gmra.mxu0 %v473
      %v560 = vpop.f32.mrf.mxu0
      %v561 = vadd.f32 0.0, %v560
      %562 = vmatmul.f32.gmra.mxu0 %v474
      %v563 = vpop.f32.mrf.mxu0
      %v564 = vadd.f32 0.0, %v563
      %565 = vmatmul.f32.gmra.mxu0 %v475
      %v566 = vpop.f32.mrf.mxu0
      %v567 = vadd.f32 0.0, %v566
      %568 = vmatmul.f32.gmra.mxu0 %v476
      %v569 = vpop.f32.mrf.mxu0
      %v570 = vadd.f32 0.0, %v569
      %571 = vmatmul.f32.gmra.mxu0 %v477
      %v572 = vpop.f32.mrf.mxu0
      %v573 = vadd.f32 0.0, %v572
      %574 = vmatmul.f32.gmra.mxu0 %v478
      %v575 = vpop.f32.mrf.mxu0
      %v576 = vadd.f32 0.0, %v575
      %577 = vmatmul.f32.gmra.mxu0 %v479
      %v578 = vpop.f32.mrf.mxu0
      %v579 = vadd.f32 0.0, %v578
      %580 = vmatmul.f32.gmra.mxu0 %v480
      %v581 = vpop.f32.mrf.mxu0
      %v582 = vadd.f32 0.0, %v581
      %583 = vmatmul.f32.gmra.mxu0 %v481
      %v584 = vpop.f32.mrf.mxu0
      %v585 = vadd.f32 0.0, %v584
      %586 = vmatmul.f32.gmra.mxu0 %v482
      %v587 = vpop.f32.mrf.mxu0
      %v588 = vadd.f32 0.0, %v587
      %589 = vdwg.mxu0
      %v591 = vperm.slane %v445, 0
      %v593 = vmul.f32 %v501, %v591
      %v594 = vmul.f32 %v504, %v591
      %v595 = vmul.f32 %v507, %v591
      %v596 = vmul.f32 %v510, %v591
      %v597 = vmul.f32 %v513, %v591
      %v598 = vmul.f32 %v516, %v591
      %v599 = vmul.f32 %v519, %v591
      %v600 = vmul.f32 %v522, %v591
      %v601 = vmul.f32 %v525, %v591
      %v602 = vmul.f32 %v528, %v591
      %v603 = vmul.f32 %v531, %v591
      %v604 = vmul.f32 %v534, %v591
      %v605 = vmul.f32 %v537, %v591
      %v606 = vmul.f32 %v540, %v591
      %v607 = vmul.f32 %v543, %v591
      %v608 = vmul.f32 %v546, %v591
      %v609 = vmul.f32 %v549, %v591
      %v610 = vmul.f32 %v552, %v591
      %v611 = vmul.f32 %v555, %v591
      %v612 = vmul.f32 %v558, %v591
      %v613 = vmul.f32 %v561, %v591
      %v614 = vmul.f32 %v564, %v591
      %v615 = vmul.f32 %v567, %v591
      %v616 = vmul.f32 %v570, %v591
      %v617 = vmul.f32 %v573, %v591
      %v618 = vmul.f32 %v576, %v591
      %v619 = vmul.f32 %v579, %v591
      %v620 = vmul.f32 %v582, %v591
      %v621 = vmul.f32 %v585, %v591
      %v622 = vmul.f32 %v588, %v591
      %v624 = vperm.slane %v446, 0
      %v626 = vadd.f32 %v593, %v624
      %v627 = vadd.f32 %v594, %v624
      %v628 = vadd.f32 %v595, %v624
      %v629 = vadd.f32 %v596, %v624
      %v630 = vadd.f32 %v597, %v624
      %v631 = vadd.f32 %v598, %v624
      %v632 = vadd.f32 %v599, %v624
      %v633 = vadd.f32 %v600, %v624
      %v634 = vadd.f32 %v601, %v624
      %v635 = vadd.f32 %v602, %v624
      %v636 = vadd.f32 %v603, %v624
      %v637 = vadd.f32 %v604, %v624
      %v638 = vadd.f32 %v605, %v624
      %v639 = vadd.f32 %v606, %v624
      %v640 = vadd.f32 %v607, %v624
      %v641 = vadd.f32 %v608, %v624
      %v642 = vadd.f32 %v609, %v624
      %v643 = vadd.f32 %v610, %v624
      %v644 = vadd.f32 %v611, %v624
      %v645 = vadd.f32 %v612, %v624
      %v646 = vadd.f32 %v613, %v624
      %v647 = vadd.f32 %v614, %v624
      %v648 = vadd.f32 %v615, %v624
      %v649 = vadd.f32 %v616, %v624
      %v650 = vadd.f32 %v617, %v624
      %v651 = vadd.f32 %v618, %v624
      %v652 = vadd.f32 %v619, %v624
      %v653 = vadd.f32 %v620, %v624
      %v654 = vadd.f32 %v621, %v624
      %v655 = vadd.f32 %v622, %v624
      %v656 = vmax.f32 %v626, 0.0
      %v657 = vmax.f32 %v627, 0.0
      %v658 = vmax.f32 %v628, 0.0
      %v659 = vmax.f32 %v629, 0.0
      %v660 = vmax.f32 %v630, 0.0
      %v661 = vmax.f32 %v631, 0.0
      %v662 = vmax.f32 %v632, 0.0
      %v663 = vmax.f32 %v633, 0.0
      %v664 = vmax.f32 %v634, 0.0
      %v665 = vmax.f32 %v635, 0.0
      %v666 = vmax.f32 %v636, 0.0
      %v667 = vmax.f32 %v637, 0.0
      %v668 = vmax.f32 %v638, 0.0
      %v669 = vmax.f32 %v639, 0.0
      %v670 = vmax.f32 %v640, 0.0
      %v671 = vmax.f32 %v641, 0.0
      %v672 = vmax.f32 %v642, 0.0
      %v673 = vmax.f32 %v643, 0.0
      %v674 = vmax.f32 %v644, 0.0
      %v675 = vmax.f32 %v645, 0.0
      %v676 = vmax.f32 %v646, 0.0
      %v677 = vmax.f32 %v647, 0.0
      %v678 = vmax.f32 %v648, 0.0
      %v679 = vmax.f32 %v649, 0.0
      %v680 = vmax.f32 %v650, 0.0
      %v681 = vmax.f32 %v651, 0.0
      %v682 = vmax.f32 %v652, 0.0
      %v683 = vmax.f32 %v653, 0.0
      %v684 = vmax.f32 %v654, 0.0
      %v685 = vmax.f32 %v655, 0.0
      %s686 = scalar_lea.vmem %s10, %s451
      %v687 = vld [vmem:[%s686] sm:$0xff]
      %v688 = vld [vmem:[%s686 + $0x8] sm:$0xff]
      %v689 = vld [vmem:[%s686 + $0x10] sm:$0xff]
      %v690 = vld [vmem:[%s686 + $0x18] sm:$0xff]
      %v691 = vld [vmem:[%s686 + $0x20] sm:$0xff]
      %v692 = vld [vmem:[%s686 + $0x28] sm:$0xff]
      %v693 = vld [vmem:[%s686 + $0x30] sm:$0xff]
      %v694 = vld [vmem:[%s686 + $0x38] sm:$0xff]
      %v695 = vld [vmem:[%s686 + $0x40] sm:$0xff]
      %v696 = vld [vmem:[%s686 + $0x48] sm:$0xff]
      %v697 = vld [vmem:[%s686 + $0x50] sm:$0xff]
      %v698 = vld [vmem:[%s686 + $0x58] sm:$0xff]
      %v699 = vld [vmem:[%s686 + $0x60] sm:$0xff]
      %v700 = vld [vmem:[%s686 + $0x68] sm:$0xff]
      %v701 = vld [vmem:[%s686 + $0x70] sm:$0xff]
      %v702 = vld [vmem:[%s686 + $0x78] sm:$0xff]
      %v703 = vld [vmem:[%s686 + $0x80] sm:$0xff]
      %v704 = vld [vmem:[%s686 + $0x88] sm:$0xff]
      %v705 = vld [vmem:[%s686 + $0x90] sm:$0xff]
      %v706 = vld [vmem:[%s686 + $0x98] sm:$0xff]
      %v707 = vld [vmem:[%s686 + $0xa0] sm:$0xff]
      %v708 = vld [vmem:[%s686 + $0xa8] sm:$0xff]
      %v709 = vld [vmem:[%s686 + $0xb0] sm:$0xff]
      %v710 = vld [vmem:[%s686 + $0xb8] sm:$0xff]
      %v711 = vld [vmem:[%s686 + $0xc0] sm:$0xff]
      %v712 = vld [vmem:[%s686 + $0xc8] sm:$0xff]
      %v713 = vld [vmem:[%s686 + $0xd0] sm:$0xff]
      %v714 = vld [vmem:[%s686 + $0xd8] sm:$0xff]
      %v715 = vld [vmem:[%s686 + $0xe0] sm:$0xff]
      %v716 = vld [vmem:[%s686 + $0xe8] sm:$0xff]
      %v717 = vmul.f32 %v656, %v687
      %v718 = vmul.f32 %v657, %v688
      %v719 = vmul.f32 %v658, %v689
      %v720 = vmul.f32 %v659, %v690
      %v721 = vmul.f32 %v660, %v691
      %v722 = vmul.f32 %v661, %v692
      %v723 = vmul.f32 %v662, %v693
      %v724 = vmul.f32 %v663, %v694
      %v725 = vmul.f32 %v664, %v695
      %v726 = vmul.f32 %v665, %v696
      %v727 = vmul.f32 %v666, %v697
      %v728 = vmul.f32 %v667, %v698
      %v729 = vmul.f32 %v668, %v699
      %v730 = vmul.f32 %v669, %v700
      %v731 = vmul.f32 %v670, %v701
      %v732 = vmul.f32 %v671, %v702
      %v733 = vmul.f32 %v672, %v703
      %v734 = vmul.f32 %v673, %v704
      %v735 = vmul.f32 %v674, %v705
      %v736 = vmul.f32 %v675, %v706
      %v737 = vmul.f32 %v676, %v707
      %v738 = vmul.f32 %v677, %v708
      %v739 = vmul.f32 %v678, %v709
      %v740 = vmul.f32 %v679, %v710
      %v741 = vmul.f32 %v680, %v711
      %v742 = vmul.f32 %v681, %v712
      %v743 = vmul.f32 %v682, %v713
      %v744 = vmul.f32 %v683, %v714
      %v745 = vmul.f32 %v684, %v715
      %v746 = vmul.f32 %v685, %v716
      %747 = vst [vmem:[#allocation2] sm:$0xff] %v717
      %748 = vst [vmem:[#allocation2 + $0x8] sm:$0xff] %v718
      %749 = vst [vmem:[#allocation2 + $0x10] sm:$0xff] %v719
      %750 = vst [vmem:[#allocation2 + $0x18] sm:$0xff] %v720
      %751 = vst [vmem:[#allocation2 + $0x20] sm:$0xff] %v721
      %752 = vst [vmem:[#allocation2 + $0x28] sm:$0xff] %v722
      %753 = vst [vmem:[#allocation2 + $0x30] sm:$0xff] %v723
      %754 = vst [vmem:[#allocation2 + $0x38] sm:$0xff] %v724
      %755 = vst [vmem:[#allocation2 + $0x40] sm:$0xff] %v725
      %756 = vst [vmem:[#allocation2 + $0x48] sm:$0xff] %v726
      %757 = vst [vmem:[#allocation2 + $0x50] sm:$0xff] %v727
      %758 = vst [vmem:[#allocation2 + $0x58] sm:$0xff] %v728
      %759 = vst [vmem:[#allocation2 + $0x60] sm:$0xff] %v729
      %760 = vst [vmem:[#allocation2 + $0x68] sm:$0xff] %v730
      %761 = vst [vmem:[#allocation2 + $0x70] sm:$0xff] %v731
      %762 = vst [vmem:[#allocation2 + $0x78] sm:$0xff] %v732
      %763 = vst [vmem:[#allocation2 + $0x80] sm:$0xff] %v733
      %764 = vst [vmem:[#allocation2 + $0x88] sm:$0xff] %v734
      %765 = vst [vmem:[#allocation2 + $0x90] sm:$0xff] %v735
      %766 = vst [vmem:[#allocation2 + $0x98] sm:$0xff] %v736
      %767 = vst [vmem:[#allocation2 + $0xa0] sm:$0xff] %v737
      %768 = vst [vmem:[#allocation2 + $0xa8] sm:$0xff] %v738
      %769 = vst [vmem:[#allocation2 + $0xb0] sm:$0xff] %v739
      %770 = vst [vmem:[#allocation2 + $0xb8] sm:$0xff] %v740
      %771 = vst [vmem:[#allocation2 + $0xc0] sm:$0xff] %v741
      %772 = vst [vmem:[#allocation2 + $0xc8] sm:$0xff] %v742
      %773 = vst [vmem:[#allocation2 + $0xd0] sm:$0xff] %v743
      %774 = vst [vmem:[#allocation2 + $0xd8] sm:$0xff] %v744
      %775 = vst [vmem:[#allocation2 + $0xe0] sm:$0xff] %v745
      %776 = vst [vmem:[#allocation2 + $0xe8] sm:$0xff] %v746
      %v777 = vld [vmem:[#allocation2] sm:$0xff]
      %v778 = vld [vmem:[#allocation2 + $0x8] sm:$0xff]
      %v779 = vld [vmem:[#allocation2 + $0x10] sm:$0xff]
      %v780 = vld [vmem:[#allocation2 + $0x18] sm:$0xff]
      %v781 = vld [vmem:[#allocation2 + $0x20] sm:$0xff]
      %v782 = vld [vmem:[#allocation2 + $0x28] sm:$0xff]
      %v783 = vld [vmem:[#allocation2 + $0x30] sm:$0xff]
      %v784 = vld [vmem:[#allocation2 + $0x38] sm:$0xff]
      %v785 = vld [vmem:[#allocation2 + $0x40] sm:$0xff]
      %v786 = vld [vmem:[#allocation2 + $0x48] sm:$0xff]
      %v787 = vld [vmem:[#allocation2 + $0x50] sm:$0xff]
      %v788 = vld [vmem:[#allocation2 + $0x58] sm:$0xff]
      %v789 = vld [vmem:[#allocation2 + $0x60] sm:$0xff]
      %v790 = vld [vmem:[#allocation2 + $0x68] sm:$0xff]
      %v791 = vld [vmem:[#allocation2 + $0x70] sm:$0xff]
      %v792 = vld [vmem:[#allocation2 + $0x78] sm:$0xff]
      %v793 = vld [vmem:[#allocation2 + $0x80] sm:$0xff]
      %v794 = vld [vmem:[#allocation2 + $0x88] sm:$0xff]
      %v795 = vld [vmem:[#allocation2 + $0x90] sm:$0xff]
      %v796 = vld [vmem:[#allocation2 + $0x98] sm:$0xff]
      %v797 = vld [vmem:[#allocation2 + $0xa0] sm:$0xff]
      %v798 = vld [vmem:[#allocation2 + $0xa8] sm:$0xff]
      %v799 = vld [vmem:[#allocation2 + $0xb0] sm:$0xff]
      %v800 = vld [vmem:[#allocation2 + $0xb8] sm:$0xff]
      %v801 = vld [vmem:[%s2] sm:$0xff]
      %v802 = vld [vmem:[%s2 + $0x8] sm:$0xff]
      %v803 = vld [vmem:[%s2 + $0x10] sm:$0xff]
      %v804 = vld [vmem:[%s2 + $0x18] sm:$0xff]
      %v805 = vld [vmem:[%s2 + $0x20] sm:$0xff]
      %v806 = vld [vmem:[%s2 + $0x28] sm:$0xff]
      %v807 = vld [vmem:[%s2 + $0x30] sm:$0xff]
      %v808 = vld [vmem:[%s2 + $0x38] sm:$0xff]
      %v809 = vld [vmem:[%s2 + $0x40] sm:$0xff]
      %v810 = vld [vmem:[%s2 + $0x48] sm:$0xff]
      %v811 = vld [vmem:[%s2 + $0x50] sm:$0xff]
      %v812 = vld [vmem:[%s2 + $0x58] sm:$0xff]
      %v813 = vld [vmem:[%s2 + $0x60] sm:$0xff]
      %v814 = vld [vmem:[%s2 + $0x68] sm:$0xff]
      %v815 = vld [vmem:[%s2 + $0x70] sm:$0xff]
      %v816 = vld [vmem:[%s2 + $0x78] sm:$0xff]
      %vm841 = vcmask 1046528
      %v842 = vrot.slane %v777, 1
      %v843 = vrot.slane %v778, 1
      %v844 = vsel %vm841, %v842, %v843
      %v845 = vrot.slane %v779, 1
      %v846 = vsel %vm841, %v843, %v845
      %v847 = vrot.slane %v780, 1
      %v848 = vrot.slane %v781, 1
      %v849 = vsel %vm841, %v847, %v848
      %v850 = vrot.slane %v782, 1
      %v851 = vsel %vm841, %v848, %v850
      %v852 = vrot.slane %v783, 1
      %v853 = vrot.slane %v784, 1
      %v854 = vsel %vm841, %v852, %v853
      %v855 = vrot.slane %v785, 1
      %v856 = vsel %vm841, %v853, %v855
      %v857 = vrot.slane %v786, 1
      %v858 = vrot.slane %v787, 1
      %v859 = vsel %vm841, %v857, %v858
      %v860 = vrot.slane %v788, 1
      %v861 = vsel %vm841, %v858, %v860
      %v862 = vrot.slane %v789, 1
      %v863 = vrot.slane %v790, 1
      %v864 = vsel %vm841, %v862, %v863
      %v865 = vrot.slane %v791, 1
      %v866 = vsel %vm841, %v863, %v865
      %v867 = vrot.slane %v792, 1
      %v868 = vrot.slane %v793, 1
      %v869 = vsel %vm841, %v867, %v868
      %v870 = vrot.slane %v794, 1
      %v871 = vsel %vm841, %v868, %v870
      %v872 = vrot.slane %v795, 1
      %v873 = vrot.slane %v796, 1
      %v874 = vsel %vm841, %v872, %v873
      %v875 = vrot.slane %v797, 1
      %v876 = vsel %vm841, %v873, %v875
      %v877 = vrot.slane %v798, 1
      %v878 = vrot.slane %v799, 1
      %v879 = vsel %vm841, %v877, %v878
      %v880 = vrot.slane %v800, 1
      %v881 = vsel %vm841, %v878, %v880
      %s898 = scalar_lea.vmem %s2, 128
      %v899 = vld [vmem:[%s898] sm:$0xff]
      %v900 = vld [vmem:[%s898 + $0x8] sm:$0xff]
      %v901 = vld [vmem:[%s898 + $0x10] sm:$0xff]
      %v902 = vld [vmem:[%s898 + $0x18] sm:$0xff]
      %v903 = vld [vmem:[%s898 + $0x20] sm:$0xff]
      %v904 = vld [vmem:[%s898 + $0x28] sm:$0xff]
      %v905 = vld [vmem:[%s898 + $0x30] sm:$0xff]
      %v906 = vld [vmem:[%s898 + $0x38] sm:$0xff]
      %v907 = vld [vmem:[%s898 + $0x40] sm:$0xff]
      %v908 = vld [vmem:[%s898 + $0x48] sm:$0xff]
      %v909 = vld [vmem:[%s898 + $0x50] sm:$0xff]
      %v910 = vld [vmem:[%s898 + $0x58] sm:$0xff]
      %v911 = vld [vmem:[%s898 + $0x60] sm:$0xff]
      %v912 = vld [vmem:[%s898 + $0x68] sm:$0xff]
      %v913 = vld [vmem:[%s898 + $0x70] sm:$0xff]
      %v914 = vld [vmem:[%s898 + $0x78] sm:$0xff]
      %915 = vmatpush.msra.mxu0 %v914
      %916 = vmatpush.msra.mxu0 %v913
      %917 = vmatpush.msra.mxu0 %v912
      %918 = vmatpush.msra.mxu0 %v911
      %919 = vmatpush.msra.mxu0 %v910
      %920 = vmatpush.msra.mxu0 %v909
      %921 = vmatpush.msra.mxu0 %v908
      %922 = vmatpush.msra.mxu0 %v907
      %923 = vmatpush.msra.mxu0 %v906
      %924 = vmatpush.msra.mxu0 %v905
      %925 = vmatpush.msra.mxu0 %v904
      %926 = vmatpush.msra.mxu0 %v903
      %927 = vmatpush.msra.mxu0 %v902
      %928 = vmatpush.msra.mxu0 %v901
      %929 = vmatpush.msra.mxu0 %v900
      %930 = vmatpush.msra.mxu0 %v899
      %931 = vmatmul.f32.gmra.mxu0 %v844
      %v932 = vpop.f32.mrf.mxu0
      %v933 = vadd.f32 0.0, %v932
      %934 = vmatmul.f32.gmra.mxu0 %v846
      %v935 = vpop.f32.mrf.mxu0
      %v936 = vadd.f32 0.0, %v935
      %937 = vmatmul.f32.gmra.mxu0 %v849
      %v938 = vpop.f32.mrf.mxu0
      %v939 = vadd.f32 0.0, %v938
      %940 = vmatmul.f32.gmra.mxu0 %v851
      %v941 = vpop.f32.mrf.mxu0
      %v942 = vadd.f32 0.0, %v941
      %943 = vmatmul.f32.gmra.mxu0 %v854
      %v944 = vpop.f32.mrf.mxu0
      %v945 = vadd.f32 0.0, %v944
      %946 = vmatmul.f32.gmra.mxu0 %v856
      %v947 = vpop.f32.mrf.mxu0
      %v948 = vadd.f32 0.0, %v947
      %949 = vmatmul.f32.gmra.mxu0 %v859
      %v950 = vpop.f32.mrf.mxu0
      %v951 = vadd.f32 0.0, %v950
      %952 = vmatmul.f32.gmra.mxu0 %v861
      %v953 = vpop.f32.mrf.mxu0
      %v954 = vadd.f32 0.0, %v953
      %955 = vmatmul.f32.gmra.mxu0 %v864
      %v956 = vpop.f32.mrf.mxu0
      %v957 = vadd.f32 0.0, %v956
      %958 = vmatmul.f32.gmra.mxu0 %v866
      %v959 = vpop.f32.mrf.mxu0
      %v960 = vadd.f32 0.0, %v959
      %961 = vmatmul.f32.gmra.mxu0 %v869
      %v962 = vpop.f32.mrf.mxu0
      %v963 = vadd.f32 0.0, %v962
      %964 = vmatmul.f32.gmra.mxu0 %v871
      %v965 = vpop.f32.mrf.mxu0
      %v966 = vadd.f32 0.0, %v965
      %967 = vmatmul.f32.gmra.mxu0 %v874
      %v968 = vpop.f32.mrf.mxu0
      %v969 = vadd.f32 0.0, %v968
      %970 = vmatmul.f32.gmra.mxu0 %v876
      %v971 = vpop.f32.mrf.mxu0
      %v972 = vadd.f32 0.0, %v971
      %973 = vmatmul.f32.gmra.mxu0 %v879
      %v974 = vpop.f32.mrf.mxu0
      %v975 = vadd.f32 0.0, %v974
      %976 = vmatmul.f32.gmra.mxu0 %v881
      %v977 = vpop.f32.mrf.mxu0
      %v978 = vadd.f32 0.0, %v977
      %979 = vdwg.mxu0
      %980 = vmatpush.msra.mxu0 %v816
      %981 = vmatpush.msra.mxu0 %v815
      %982 = vmatpush.msra.mxu0 %v814
      %983 = vmatpush.msra.mxu0 %v813
      %984 = vmatpush.msra.mxu0 %v812
      %985 = vmatpush.msra.mxu0 %v811
      %986 = vmatpush.msra.mxu0 %v810
      %987 = vmatpush.msra.mxu0 %v809
      %988 = vmatpush.msra.mxu0 %v808
      %989 = vmatpush.msra.mxu0 %v807
      %990 = vmatpush.msra.mxu0 %v806
      %991 = vmatpush.msra.mxu0 %v805
      %992 = vmatpush.msra.mxu0 %v804
      %993 = vmatpush.msra.mxu0 %v803
      %994 = vmatpush.msra.mxu0 %v802
      %995 = vmatpush.msra.mxu0 %v801
      %996 = vmatmul.f32.gmra.mxu0 %v777
      %v997 = vpop.f32.mrf.mxu0
      %v998 = vadd.f32 %v933, %v997
      %999 = vmatmul.f32.gmra.mxu0 %v778
      %v1000 = vpop.f32.mrf.mxu0
      %v1001 = vadd.f32 %v936, %v1000
      %1002 = vmatmul.f32.gmra.mxu0 %v780
      %v1003 = vpop.f32.mrf.mxu0
      %v1004 = vadd.f32 %v939, %v1003
      %1005 = vmatmul.f32.gmra.mxu0 %v781
      %v1006 = vpop.f32.mrf.mxu0
      %v1007 = vadd.f32 %v942, %v1006
      %1008 = vmatmul.f32.gmra.mxu0 %v783
      %v1009 = vpop.f32.mrf.mxu0
      %v1010 = vadd.f32 %v945, %v1009
      %1011 = vmatmul.f32.gmra.mxu0 %v784
      %v1012 = vpop.f32.mrf.mxu0
      %v1013 = vadd.f32 %v948, %v1012
      %1014 = vmatmul.f32.gmra.mxu0 %v786
      %v1015 = vpop.f32.mrf.mxu0
      %v1016 = vadd.f32 %v951, %v1015
      %1017 = vmatmul.f32.gmra.mxu0 %v787
      %v1018 = vpop.f32.mrf.mxu0
      %v1019 = vadd.f32 %v954, %v1018
      %1020 = vmatmul.f32.gmra.mxu0 %v789
      %v1021 = vpop.f32.mrf.mxu0
      %v1022 = vadd.f32 %v957, %v1021
      %1023 = vmatmul.f32.gmra.mxu0 %v790
      %v1024 = vpop.f32.mrf.mxu0
      %v1025 = vadd.f32 %v960, %v1024
      %1026 = vmatmul.f32.gmra.mxu0 %v792
      %v1027 = vpop.f32.mrf.mxu0
      %v1028 = vadd.f32 %v963, %v1027
      %1029 = vmatmul.f32.gmra.mxu0 %v793
      %v1030 = vpop.f32.mrf.mxu0
      %v1031 = vadd.f32 %v966, %v1030
      %1032 = vmatmul.f32.gmra.mxu0 %v795
      %v1033 = vpop.f32.mrf.mxu0
      %v1034 = vadd.f32 %v969, %v1033
      %1035 = vmatmul.f32.gmra.mxu0 %v796
      %v1036 = vpop.f32.mrf.mxu0
      %v1037 = vadd.f32 %v972, %v1036
      %1038 = vmatmul.f32.gmra.mxu0 %v798
      %v1039 = vpop.f32.mrf.mxu0
      %v1040 = vadd.f32 %v975, %v1039
      %1041 = vmatmul.f32.gmra.mxu0 %v799
      %v1042 = vpop.f32.mrf.mxu0
      %v1043 = vadd.f32 %v978, %v1042
      %1044 = vdwg.mxu0
      %vm1045 = vcmask 1045504
      %v1046 = vrot.slane %v777, 2
      %v1047 = vrot.slane %v778, 2
      %v1048 = vsel %vm1045, %v1046, %v1047
      %v1049 = vrot.slane %v779, 2
      %v1050 = vsel %vm1045, %v1047, %v1049
      %v1051 = vrot.slane %v780, 2
      %v1052 = vrot.slane %v781, 2
      %v1053 = vsel %vm1045, %v1051, %v1052
      %v1054 = vrot.slane %v782, 2
      %v1055 = vsel %vm1045, %v1052, %v1054
      %v1056 = vrot.slane %v783, 2
      %v1057 = vrot.slane %v784, 2
      %v1058 = vsel %vm1045, %v1056, %v1057
      %v1059 = vrot.slane %v785, 2
      %v1060 = vsel %vm1045, %v1057, %v1059
      %v1061 = vrot.slane %v786, 2
      %v1062 = vrot.slane %v787, 2
      %v1063 = vsel %vm1045, %v1061, %v1062
      %v1064 = vrot.slane %v788, 2
      %v1065 = vsel %vm1045, %v1062, %v1064
      %v1066 = vrot.slane %v789, 2
      %v1067 = vrot.slane %v790, 2
      %v1068 = vsel %vm1045, %v1066, %v1067
      %v1069 = vrot.slane %v791, 2
      %v1070 = vsel %vm1045, %v1067, %v1069
      %v1071 = vrot.slane %v792, 2
      %v1072 = vrot.slane %v793, 2
      %v1073 = vsel %vm1045, %v1071, %v1072
      %v1074 = vrot.slane %v794, 2
      %v1075 = vsel %vm1045, %v1072, %v1074
      %v1076 = vrot.slane %v795, 2
      %v1077 = vrot.slane %v796, 2
      %v1078 = vsel %vm1045, %v1076, %v1077
      %v1079 = vrot.slane %v797, 2
      %v1080 = vsel %vm1045, %v1077, %v1079
      %v1081 = vrot.slane %v798, 2
      %v1082 = vrot.slane %v799, 2
      %v1083 = vsel %vm1045, %v1081, %v1082
      %v1084 = vrot.slane %v800, 2
      %v1085 = vsel %vm1045, %v1082, %v1084
      %s1102 = scalar_lea.vmem %s2, 256
      %v1103 = vld [vmem:[%s1102] sm:$0xff]
      %v1104 = vld [vmem:[%s1102 + $0x8] sm:$0xff]
      %v1105 = vld [vmem:[%s1102 + $0x10] sm:$0xff]
      %v1106 = vld [vmem:[%s1102 + $0x18] sm:$0xff]
      %v1107 = vld [vmem:[%s1102 + $0x20] sm:$0xff]
      %v1108 = vld [vmem:[%s1102 + $0x28] sm:$0xff]
      %v1109 = vld [vmem:[%s1102 + $0x30] sm:$0xff]
      %v1110 = vld [vmem:[%s1102 + $0x38] sm:$0xff]
      %v1111 = vld [vmem:[%s1102 + $0x40] sm:$0xff]
      %v1112 = vld [vmem:[%s1102 + $0x48] sm:$0xff]
      %v1113 = vld [vmem:[%s1102 + $0x50] sm:$0xff]
      %v1114 = vld [vmem:[%s1102 + $0x58] sm:$0xff]
      %v1115 = vld [vmem:[%s1102 + $0x60] sm:$0xff]
      %v1116 = vld [vmem:[%s1102 + $0x68] sm:$0xff]
      %v1117 = vld [vmem:[%s1102 + $0x70] sm:$0xff]
      %v1118 = vld [vmem:[%s1102 + $0x78] sm:$0xff]
      %1119 = vmatpush.msra.mxu0 %v1118
      %1120 = vmatpush.msra.mxu0 %v1117
      %1121 = vmatpush.msra.mxu0 %v1116
      %1122 = vmatpush.msra.mxu0 %v1115
      %1123 = vmatpush.msra.mxu0 %v1114
      %1124 = vmatpush.msra.mxu0 %v1113
      %1125 = vmatpush.msra.mxu0 %v1112
      %1126 = vmatpush.msra.mxu0 %v1111
      %1127 = vmatpush.msra.mxu0 %v1110
      %1128 = vmatpush.msra.mxu0 %v1109
      %1129 = vmatpush.msra.mxu0 %v1108
      %1130 = vmatpush.msra.mxu0 %v1107
      %1131 = vmatpush.msra.mxu0 %v1106
      %1132 = vmatpush.msra.mxu0 %v1105
      %1133 = vmatpush.msra.mxu0 %v1104
      %1134 = vmatpush.msra.mxu0 %v1103
      %1135 = vmatmul.f32.gmra.mxu0 %v1048
      %v1136 = vpop.f32.mrf.mxu0
      %v1137 = vadd.f32 0.0, %v1136
      %1138 = vmatmul.f32.gmra.mxu0 %v1050
      %v1139 = vpop.f32.mrf.mxu0
      %v1140 = vadd.f32 0.0, %v1139
      %1141 = vmatmul.f32.gmra.mxu0 %v1053
      %v1142 = vpop.f32.mrf.mxu0
      %v1143 = vadd.f32 0.0, %v1142
      %1144 = vmatmul.f32.gmra.mxu0 %v1055
      %v1145 = vpop.f32.mrf.mxu0
      %v1146 = vadd.f32 0.0, %v1145
      %1147 = vmatmul.f32.gmra.mxu0 %v1058
      %v1148 = vpop.f32.mrf.mxu0
      %v1149 = vadd.f32 0.0, %v1148
      %1150 = vmatmul.f32.gmra.mxu0 %v1060
      %v1151 = vpop.f32.mrf.mxu0
      %v1152 = vadd.f32 0.0, %v1151
      %1153 = vmatmul.f32.gmra.mxu0 %v1063
      %v1154 = vpop.f32.mrf.mxu0
      %v1155 = vadd.f32 0.0, %v1154
      %1156 = vmatmul.f32.gmra.mxu0 %v1065
      %v1157 = vpop.f32.mrf.mxu0
      %v1158 = vadd.f32 0.0, %v1157
      %1159 = vmatmul.f32.gmra.mxu0 %v1068
      %v1160 = vpop.f32.mrf.mxu0
      %v1161 = vadd.f32 0.0, %v1160
      %1162 = vmatmul.f32.gmra.mxu0 %v1070
      %v1163 = vpop.f32.mrf.mxu0
      %v1164 = vadd.f32 0.0, %v1163
      %1165 = vmatmul.f32.gmra.mxu0 %v1073
      %v1166 = vpop.f32.mrf.mxu0
      %v1167 = vadd.f32 0.0, %v1166
      %1168 = vmatmul.f32.gmra.mxu0 %v1075
      %v1169 = vpop.f32.mrf.mxu0
      %v1170 = vadd.f32 0.0, %v1169
      %1171 = vmatmul.f32.gmra.mxu0 %v1078
      %v1172 = vpop.f32.mrf.mxu0
      %v1173 = vadd.f32 0.0, %v1172
      %1174 = vmatmul.f32.gmra.mxu0 %v1080
      %v1175 = vpop.f32.mrf.mxu0
      %v1176 = vadd.f32 0.0, %v1175
      %1177 = vmatmul.f32.gmra.mxu0 %v1083
      %v1178 = vpop.f32.mrf.mxu0
      %v1179 = vadd.f32 0.0, %v1178
      %1180 = vmatmul.f32.gmra.mxu0 %v1085
      %v1181 = vpop.f32.mrf.mxu0
      %v1182 = vadd.f32 0.0, %v1181
      %1183 = vdwg.mxu0
      %v1184 = vadd.f32 %v998, %v1137
      %v1185 = vadd.f32 %v1001, %v1140
      %v1186 = vadd.f32 %v1004, %v1143
      %v1187 = vadd.f32 %v1007, %v1146
      %v1188 = vadd.f32 %v1010, %v1149
      %v1189 = vadd.f32 %v1013, %v1152
      %v1190 = vadd.f32 %v1016, %v1155
      %v1191 = vadd.f32 %v1019, %v1158
      %v1192 = vadd.f32 %v1022, %v1161
      %v1193 = vadd.f32 %v1025, %v1164
      %v1194 = vadd.f32 %v1028, %v1167
      %v1195 = vadd.f32 %v1031, %v1170
      %v1196 = vadd.f32 %v1034, %v1173
      %v1197 = vadd.f32 %v1037, %v1176
      %v1198 = vadd.f32 %v1040, %v1179
      %v1199 = vadd.f32 %v1043, %v1182
      %s1200 = scalar_lea.vmem [#allocation2], 24
      %v1201 = vld [vmem:[%s1200] sm:$0xff]
      %v1202 = vld [vmem:[%s1200 + $0x8] sm:$0xff]
      %v1203 = vld [vmem:[%s1200 + $0x10] sm:$0xff]
      %v1204 = vld [vmem:[%s1200 + $0x18] sm:$0xff]
      %v1205 = vld [vmem:[%s1200 + $0x20] sm:$0xff]
      %v1206 = vld [vmem:[%s1200 + $0x28] sm:$0xff]
      %v1207 = vld [vmem:[%s1200 + $0x30] sm:$0xff]
      %v1208 = vld [vmem:[%s1200 + $0x38] sm:$0xff]
      %v1209 = vld [vmem:[%s1200 + $0x40] sm:$0xff]
      %v1210 = vld [vmem:[%s1200 + $0x48] sm:$0xff]
      %v1211 = vld [vmem:[%s1200 + $0x50] sm:$0xff]
      %v1212 = vld [vmem:[%s1200 + $0x58] sm:$0xff]
      %v1213 = vld [vmem:[%s1200 + $0x60] sm:$0xff]
      %v1214 = vld [vmem:[%s1200 + $0x68] sm:$0xff]
      %v1215 = vld [vmem:[%s1200 + $0x70] sm:$0xff]
      %v1216 = vld [vmem:[%s1200 + $0x78] sm:$0xff]
      %v1217 = vld [vmem:[%s1200 + $0x80] sm:$0xff]
      %v1218 = vld [vmem:[%s1200 + $0x88] sm:$0xff]
      %v1219 = vld [vmem:[%s1200 + $0x90] sm:$0xff]
      %v1220 = vld [vmem:[%s1200 + $0x98] sm:$0xff]
      %v1221 = vld [vmem:[%s1200 + $0xa0] sm:$0xff]
      %v1222 = vld [vmem:[%s1200 + $0xa8] sm:$0xff]
      %v1223 = vld [vmem:[%s1200 + $0xb0] sm:$0xff]
      %v1224 = vld [vmem:[%s1200 + $0xb8] sm:$0xff]
      %s1225 = scalar_lea.vmem %s2, 384
      %v1226 = vld [vmem:[%s1225] sm:$0xff]
      %v1227 = vld [vmem:[%s1225 + $0x8] sm:$0xff]
      %v1228 = vld [vmem:[%s1225 + $0x10] sm:$0xff]
      %v1229 = vld [vmem:[%s1225 + $0x18] sm:$0xff]
      %v1230 = vld [vmem:[%s1225 + $0x20] sm:$0xff]
      %v1231 = vld [vmem:[%s1225 + $0x28] sm:$0xff]
      %v1232 = vld [vmem:[%s1225 + $0x30] sm:$0xff]
      %v1233 = vld [vmem:[%s1225 + $0x38] sm:$0xff]
      %v1234 = vld [vmem:[%s1225 + $0x40] sm:$0xff]
      %v1235 = vld [vmem:[%s1225 + $0x48] sm:$0xff]
      %v1236 = vld [vmem:[%s1225 + $0x50] sm:$0xff]
      %v1237 = vld [vmem:[%s1225 + $0x58] sm:$0xff]
      %v1238 = vld [vmem:[%s1225 + $0x60] sm:$0xff]
      %v1239 = vld [vmem:[%s1225 + $0x68] sm:$0xff]
      %v1240 = vld [vmem:[%s1225 + $0x70] sm:$0xff]
      %v1241 = vld [vmem:[%s1225 + $0x78] sm:$0xff]
      %1242 = vmatpush.msra.mxu0 %v1241
      %1243 = vmatpush.msra.mxu0 %v1240
      %1244 = vmatpush.msra.mxu0 %v1239
      %1245 = vmatpush.msra.mxu0 %v1238
      %1246 = vmatpush.msra.mxu0 %v1237
      %1247 = vmatpush.msra.mxu0 %v1236
      %1248 = vmatpush.msra.mxu0 %v1235
      %1249 = vmatpush.msra.mxu0 %v1234
      %1250 = vmatpush.msra.mxu0 %v1233
      %1251 = vmatpush.msra.mxu0 %v1232
      %1252 = vmatpush.msra.mxu0 %v1231
      %1253 = vmatpush.msra.mxu0 %v1230
      %1254 = vmatpush.msra.mxu0 %v1229
      %1255 = vmatpush.msra.mxu0 %v1228
      %1256 = vmatpush.msra.mxu0 %v1227
      %1257 = vmatpush.msra.mxu0 %v1226
      %1258 = vmatmul.f32.gmra.mxu0 %v1201
      %v1259 = vpop.f32.mrf.mxu0
      %v1260 = vadd.f32 0.0, %v1259
      %1261 = vmatmul.f32.gmra.mxu0 %v1202
      %v1262 = vpop.f32.mrf.mxu0
      %v1263 = vadd.f32 0.0, %v1262
      %1264 = vmatmul.f32.gmra.mxu0 %v1204
      %v1265 = vpop.f32.mrf.mxu0
      %v1266 = vadd.f32 0.0, %v1265
      %1267 = vmatmul.f32.gmra.mxu0 %v1205
      %v1268 = vpop.f32.mrf.mxu0
      %v1269 = vadd.f32 0.0, %v1268
      %1270 = vmatmul.f32.gmra.mxu0 %v1207
      %v1271 = vpop.f32.mrf.mxu0
      %v1272 = vadd.f32 0.0, %v1271
      %1273 = vmatmul.f32.gmra.mxu0 %v1208
      %v1274 = vpop.f32.mrf.mxu0
      %v1275 = vadd.f32 0.0, %v1274
      %1276 = vmatmul.f32.gmra.mxu0 %v1210
      %v1277 = vpop.f32.mrf.mxu0
      %v1278 = vadd.f32 0.0, %v1277
      %1279 = vmatmul.f32.gmra.mxu0 %v1211
      %v1280 = vpop.f32.mrf.mxu0
      %v1281 = vadd.f32 0.0, %v1280
      %1282 = vmatmul.f32.gmra.mxu0 %v1213
      %v1283 = vpop.f32.mrf.mxu0
      %v1284 = vadd.f32 0.0, %v1283
      %1285 = vmatmul.f32.gmra.mxu0 %v1214
      %v1286 = vpop.f32.mrf.mxu0
      %v1287 = vadd.f32 0.0, %v1286
      %1288 = vmatmul.f32.gmra.mxu0 %v1216
      %v1289 = vpop.f32.mrf.mxu0
      %v1290 = vadd.f32 0.0, %v1289
      %1291 = vmatmul.f32.gmra.mxu0 %v1217
      %v1292 = vpop.f32.mrf.mxu0
      %v1293 = vadd.f32 0.0, %v1292
      %1294 = vmatmul.f32.gmra.mxu0 %v1219
      %v1295 = vpop.f32.mrf.mxu0
      %v1296 = vadd.f32 0.0, %v1295
      %1297 = vmatmul.f32.gmra.mxu0 %v1220
      %v1298 = vpop.f32.mrf.mxu0
      %v1299 = vadd.f32 0.0, %v1298
      %1300 = vmatmul.f32.gmra.mxu0 %v1222
      %v1301 = vpop.f32.mrf.mxu0
      %v1302 = vadd.f32 0.0, %v1301
      %1303 = vmatmul.f32.gmra.mxu0 %v1223
      %v1304 = vpop.f32.mrf.mxu0
      %v1305 = vadd.f32 0.0, %v1304
      %1306 = vdwg.mxu0
      %v1307 = vadd.f32 %v1184, %v1260
      %v1308 = vadd.f32 %v1185, %v1263
      %v1309 = vadd.f32 %v1186, %v1266
      %v1310 = vadd.f32 %v1187, %v1269
      %v1311 = vadd.f32 %v1188, %v1272
      %v1312 = vadd.f32 %v1189, %v1275
      %v1313 = vadd.f32 %v1190, %v1278
      %v1314 = vadd.f32 %v1191, %v1281
      %v1315 = vadd.f32 %v1192, %v1284
      %v1316 = vadd.f32 %v1193, %v1287
      %v1317 = vadd.f32 %v1194, %v1290
      %v1318 = vadd.f32 %v1195, %v1293
      %v1319 = vadd.f32 %v1196, %v1296
      %v1320 = vadd.f32 %v1197, %v1299
      %v1321 = vadd.f32 %v1198, %v1302
      %v1322 = vadd.f32 %v1199, %v1305
      %v1347 = vrot.slane %v1201, 1
      %v1348 = vrot.slane %v1202, 1
      %v1349 = vsel %vm841, %v1347, %v1348
      %v1350 = vrot.slane %v1203, 1
      %v1351 = vsel %vm841, %v1348, %v1350
      %v1352 = vrot.slane %v1204, 1
      %v1353 = vrot.slane %v1205, 1
      %v1354 = vsel %vm841, %v1352, %v1353
      %v1355 = vrot.slane %v1206, 1
      %v1356 = vsel %vm841, %v1353, %v1355
      %v1357 = vrot.slane %v1207, 1
      %v1358 = vrot.slane %v1208, 1
      %v1359 = vsel %vm841, %v1357, %v1358
      %v1360 = vrot.slane %v1209, 1
      %v1361 = vsel %vm841, %v1358, %v1360
      %v1362 = vrot.slane %v1210, 1
      %v1363 = vrot.slane %v1211, 1
      %v1364 = vsel %vm841, %v1362, %v1363
      %v1365 = vrot.slane %v1212, 1
      %v1366 = vsel %vm841, %v1363, %v1365
      %v1367 = vrot.slane %v1213, 1
      %v1368 = vrot.slane %v1214, 1
      %v1369 = vsel %vm841, %v1367, %v1368
      %v1370 = vrot.slane %v1215, 1
      %v1371 = vsel %vm841, %v1368, %v1370
      %v1372 = vrot.slane %v1216, 1
      %v1373 = vrot.slane %v1217, 1
      %v1374 = vsel %vm841, %v1372, %v1373
      %v1375 = vrot.slane %v1218, 1
      %v1376 = vsel %vm841, %v1373, %v1375
      %v1377 = vrot.slane %v1219, 1
      %v1378 = vrot.slane %v1220, 1
      %v1379 = vsel %vm841, %v1377, %v1378
      %v1380 = vrot.slane %v1221, 1
      %v1381 = vsel %vm841, %v1378, %v1380
      %v1382 = vrot.slane %v1222, 1
      %v1383 = vrot.slane %v1223, 1
      %v1384 = vsel %vm841, %v1382, %v1383
      %v1385 = vrot.slane %v1224, 1
      %v1386 = vsel %vm841, %v1383, %v1385
      %s1403 = scalar_lea.vmem %s2, 512
      %v1404 = vld [vmem:[%s1403] sm:$0xff]
      %v1405 = vld [vmem:[%s1403 + $0x8] sm:$0xff]
      %v1406 = vld [vmem:[%s1403 + $0x10] sm:$0xff]
      %v1407 = vld [vmem:[%s1403 + $0x18] sm:$0xff]
      %v1408 = vld [vmem:[%s1403 + $0x20] sm:$0xff]
      %v1409 = vld [vmem:[%s1403 + $0x28] sm:$0xff]
      %v1410 = vld [vmem:[%s1403 + $0x30] sm:$0xff]
      %v1411 = vld [vmem:[%s1403 + $0x38] sm:$0xff]
      %v1412 = vld [vmem:[%s1403 + $0x40] sm:$0xff]
      %v1413 = vld [vmem:[%s1403 + $0x48] sm:$0xff]
      %v1414 = vld [vmem:[%s1403 + $0x50] sm:$0xff]
      %v1415 = vld [vmem:[%s1403 + $0x58] sm:$0xff]
      %v1416 = vld [vmem:[%s1403 + $0x60] sm:$0xff]
      %v1417 = vld [vmem:[%s1403 + $0x68] sm:$0xff]
      %v1418 = vld [vmem:[%s1403 + $0x70] sm:$0xff]
      %v1419 = vld [vmem:[%s1403 + $0x78] sm:$0xff]
      %1420 = vmatpush.msra.mxu0 %v1419
      %1421 = vmatpush.msra.mxu0 %v1418
      %1422 = vmatpush.msra.mxu0 %v1417
      %1423 = vmatpush.msra.mxu0 %v1416
      %1424 = vmatpush.msra.mxu0 %v1415
      %1425 = vmatpush.msra.mxu0 %v1414
      %1426 = vmatpush.msra.mxu0 %v1413
      %1427 = vmatpush.msra.mxu0 %v1412
      %1428 = vmatpush.msra.mxu0 %v1411
      %1429 = vmatpush.msra.mxu0 %v1410
      %1430 = vmatpush.msra.mxu0 %v1409
      %1431 = vmatpush.msra.mxu0 %v1408
      %1432 = vmatpush.msra.mxu0 %v1407
      %1433 = vmatpush.msra.mxu0 %v1406
      %1434 = vmatpush.msra.mxu0 %v1405
      %1435 = vmatpush.msra.mxu0 %v1404
      %1436 = vmatmul.f32.gmra.mxu0 %v1349
      %v1437 = vpop.f32.mrf.mxu0
      %v1438 = vadd.f32 0.0, %v1437
      %1439 = vmatmul.f32.gmra.mxu0 %v1351
      %v1440 = vpop.f32.mrf.mxu0
      %v1441 = vadd.f32 0.0, %v1440
      %1442 = vmatmul.f32.gmra.mxu0 %v1354
      %v1443 = vpop.f32.mrf.mxu0
      %v1444 = vadd.f32 0.0, %v1443
      %1445 = vmatmul.f32.gmra.mxu0 %v1356
      %v1446 = vpop.f32.mrf.mxu0
      %v1447 = vadd.f32 0.0, %v1446
      %1448 = vmatmul.f32.gmra.mxu0 %v1359
      %v1449 = vpop.f32.mrf.mxu0
      %v1450 = vadd.f32 0.0, %v1449
      %1451 = vmatmul.f32.gmra.mxu0 %v1361
      %v1452 = vpop.f32.mrf.mxu0
      %v1453 = vadd.f32 0.0, %v1452
      %1454 = vmatmul.f32.gmra.mxu0 %v1364
      %v1455 = vpop.f32.mrf.mxu0
      %v1456 = vadd.f32 0.0, %v1455
      %1457 = vmatmul.f32.gmra.mxu0 %v1366
      %v1458 = vpop.f32.mrf.mxu0
      %v1459 = vadd.f32 0.0, %v1458
      %1460 = vmatmul.f32.gmra.mxu0 %v1369
      %v1461 = vpop.f32.mrf.mxu0
      %v1462 = vadd.f32 0.0, %v1461
      %1463 = vmatmul.f32.gmra.mxu0 %v1371
      %v1464 = vpop.f32.mrf.mxu0
      %v1465 = vadd.f32 0.0, %v1464
      %1466 = vmatmul.f32.gmra.mxu0 %v1374
      %v1467 = vpop.f32.mrf.mxu0
      %v1468 = vadd.f32 0.0, %v1467
      %1469 = vmatmul.f32.gmra.mxu0 %v1376
      %v1470 = vpop.f32.mrf.mxu0
      %v1471 = vadd.f32 0.0, %v1470
      %1472 = vmatmul.f32.gmra.mxu0 %v1379
      %v1473 = vpop.f32.mrf.mxu0
      %v1474 = vadd.f32 0.0, %v1473
      %1475 = vmatmul.f32.gmra.mxu0 %v1381
      %v1476 = vpop.f32.mrf.mxu0
      %v1477 = vadd.f32 0.0, %v1476
      %1478 = vmatmul.f32.gmra.mxu0 %v1384
      %v1479 = vpop.f32.mrf.mxu0
      %v1480 = vadd.f32 0.0, %v1479
      %1481 = vmatmul.f32.gmra.mxu0 %v1386
      %v1482 = vpop.f32.mrf.mxu0
      %v1483 = vadd.f32 0.0, %v1482
      %1484 = vdwg.mxu0
      %v1485 = vadd.f32 %v1307, %v1438
      %v1486 = vadd.f32 %v1308, %v1441
      %v1487 = vadd.f32 %v1309, %v1444
      %v1488 = vadd.f32 %v1310, %v1447
      %v1489 = vadd.f32 %v1311, %v1450
      %v1490 = vadd.f32 %v1312, %v1453
      %v1491 = vadd.f32 %v1313, %v1456
      %v1492 = vadd.f32 %v1314, %v1459
      %v1493 = vadd.f32 %v1315, %v1462
      %v1494 = vadd.f32 %v1316, %v1465
      %v1495 = vadd.f32 %v1317, %v1468
      %v1496 = vadd.f32 %v1318, %v1471
      %v1497 = vadd.f32 %v1319, %v1474
      %v1498 = vadd.f32 %v1320, %v1477
      %v1499 = vadd.f32 %v1321, %v1480
      %v1500 = vadd.f32 %v1322, %v1483
      %v1501 = vrot.slane %v1201, 2
      %v1502 = vrot.slane %v1202, 2
      %v1503 = vsel %vm1045, %v1501, %v1502
      %v1504 = vrot.slane %v1203, 2
      %v1505 = vsel %vm1045, %v1502, %v1504
      %v1506 = vrot.slane %v1204, 2
      %v1507 = vrot.slane %v1205, 2
      %v1508 = vsel %vm1045, %v1506, %v1507
      %v1509 = vrot.slane %v1206, 2
      %v1510 = vsel %vm1045, %v1507, %v1509
      %v1511 = vrot.slane %v1207, 2
      %v1512 = vrot.slane %v1208, 2
      %v1513 = vsel %vm1045, %v1511, %v1512
      %v1514 = vrot.slane %v1209, 2
      %v1515 = vsel %vm1045, %v1512, %v1514
      %v1516 = vrot.slane %v1210, 2
      %v1517 = vrot.slane %v1211, 2
      %v1518 = vsel %vm1045, %v1516, %v1517
      %v1519 = vrot.slane %v1212, 2
      %v1520 = vsel %vm1045, %v1517, %v1519
      %v1521 = vrot.slane %v1213, 2
      %v1522 = vrot.slane %v1214, 2
      %v1523 = vsel %vm1045, %v1521, %v1522
      %v1524 = vrot.slane %v1215, 2
      %v1525 = vsel %vm1045, %v1522, %v1524
      %v1526 = vrot.slane %v1216, 2
      %v1527 = vrot.slane %v1217, 2
      %v1528 = vsel %vm1045, %v1526, %v1527
      %v1529 = vrot.slane %v1218, 2
      %v1530 = vsel %vm1045, %v1527, %v1529
      %v1531 = vrot.slane %v1219, 2
      %v1532 = vrot.slane %v1220, 2
      %v1533 = vsel %vm1045, %v1531, %v1532
      %v1534 = vrot.slane %v1221, 2
      %v1535 = vsel %vm1045, %v1532, %v1534
      %v1536 = vrot.slane %v1222, 2
      %v1537 = vrot.slane %v1223, 2
      %v1538 = vsel %vm1045, %v1536, %v1537
      %v1539 = vrot.slane %v1224, 2
      %v1540 = vsel %vm1045, %v1537, %v1539
      %s1557 = scalar_lea.vmem %s2, 640
      %v1558 = vld [vmem:[%s1557] sm:$0xff]
      %v1559 = vld [vmem:[%s1557 + $0x8] sm:$0xff]
      %v1560 = vld [vmem:[%s1557 + $0x10] sm:$0xff]
      %v1561 = vld [vmem:[%s1557 + $0x18] sm:$0xff]
      %v1562 = vld [vmem:[%s1557 + $0x20] sm:$0xff]
      %v1563 = vld [vmem:[%s1557 + $0x28] sm:$0xff]
      %v1564 = vld [vmem:[%s1557 + $0x30] sm:$0xff]
      %v1565 = vld [vmem:[%s1557 + $0x38] sm:$0xff]
      %v1566 = vld [vmem:[%s1557 + $0x40] sm:$0xff]
      %v1567 = vld [vmem:[%s1557 + $0x48] sm:$0xff]
      %v1568 = vld [vmem:[%s1557 + $0x50] sm:$0xff]
      %v1569 = vld [vmem:[%s1557 + $0x58] sm:$0xff]
      %v1570 = vld [vmem:[%s1557 + $0x60] sm:$0xff]
      %v1571 = vld [vmem:[%s1557 + $0x68] sm:$0xff]
      %v1572 = vld [vmem:[%s1557 + $0x70] sm:$0xff]
      %v1573 = vld [vmem:[%s1557 + $0x78] sm:$0xff]
      %1574 = vmatpush.msra.mxu0 %v1573
      %1575 = vmatpush.msra.mxu0 %v1572
      %1576 = vmatpush.msra.mxu0 %v1571
      %1577 = vmatpush.msra.mxu0 %v1570
      %1578 = vmatpush.msra.mxu0 %v1569
      %1579 = vmatpush.msra.mxu0 %v1568
      %1580 = vmatpush.msra.mxu0 %v1567
      %1581 = vmatpush.msra.mxu0 %v1566
      %1582 = vmatpush.msra.mxu0 %v1565
      %1583 = vmatpush.msra.mxu0 %v1564
      %1584 = vmatpush.msra.mxu0 %v1563
      %1585 = vmatpush.msra.mxu0 %v1562
      %1586 = vmatpush.msra.mxu0 %v1561
      %1587 = vmatpush.msra.mxu0 %v1560
      %1588 = vmatpush.msra.mxu0 %v1559
      %1589 = vmatpush.msra.mxu0 %v1558
      %1590 = vmatmul.f32.gmra.mxu0 %v1503
      %v1591 = vpop.f32.mrf.mxu0
      %v1592 = vadd.f32 0.0, %v1591
      %1593 = vmatmul.f32.gmra.mxu0 %v1505
      %v1594 = vpop.f32.mrf.mxu0
      %v1595 = vadd.f32 0.0, %v1594
      %1596 = vmatmul.f32.gmra.mxu0 %v1508
      %v1597 = vpop.f32.mrf.mxu0
      %v1598 = vadd.f32 0.0, %v1597
      %1599 = vmatmul.f32.gmra.mxu0 %v1510
      %v1600 = vpop.f32.mrf.mxu0
      %v1601 = vadd.f32 0.0, %v1600
      %1602 = vmatmul.f32.gmra.mxu0 %v1513
      %v1603 = vpop.f32.mrf.mxu0
      %v1604 = vadd.f32 0.0, %v1603
      %1605 = vmatmul.f32.gmra.mxu0 %v1515
      %v1606 = vpop.f32.mrf.mxu0
      %v1607 = vadd.f32 0.0, %v1606
      %1608 = vmatmul.f32.gmra.mxu0 %v1518
      %v1609 = vpop.f32.mrf.mxu0
      %v1610 = vadd.f32 0.0, %v1609
      %1611 = vmatmul.f32.gmra.mxu0 %v1520
      %v1612 = vpop.f32.mrf.mxu0
      %v1613 = vadd.f32 0.0, %v1612
      %1614 = vmatmul.f32.gmra.mxu0 %v1523
      %v1615 = vpop.f32.mrf.mxu0
      %v1616 = vadd.f32 0.0, %v1615
      %1617 = vmatmul.f32.gmra.mxu0 %v1525
      %v1618 = vpop.f32.mrf.mxu0
      %v1619 = vadd.f32 0.0, %v1618
      %1620 = vmatmul.f32.gmra.mxu0 %v1528
      %v1621 = vpop.f32.mrf.mxu0
      %v1622 = vadd.f32 0.0, %v1621
      %1623 = vmatmul.f32.gmra.mxu0 %v1530
      %v1624 = vpop.f32.mrf.mxu0
      %v1625 = vadd.f32 0.0, %v1624
      %1626 = vmatmul.f32.gmra.mxu0 %v1533
      %v1627 = vpop.f32.mrf.mxu0
      %v1628 = vadd.f32 0.0, %v1627
      %1629 = vmatmul.f32.gmra.mxu0 %v1535
      %v1630 = vpop.f32.mrf.mxu0
      %v1631 = vadd.f32 0.0, %v1630
      %1632 = vmatmul.f32.gmra.mxu0 %v1538
      %v1633 = vpop.f32.mrf.mxu0
      %v1634 = vadd.f32 0.0, %v1633
      %1635 = vmatmul.f32.gmra.mxu0 %v1540
      %v1636 = vpop.f32.mrf.mxu0
      %v1637 = vadd.f32 0.0, %v1636
      %1638 = vdwg.mxu0
      %v1639 = vadd.f32 %v1485, %v1592
      %v1640 = vadd.f32 %v1486, %v1595
      %v1641 = vadd.f32 %v1487, %v1598
      %v1642 = vadd.f32 %v1488, %v1601
      %v1643 = vadd.f32 %v1489, %v1604
      %v1644 = vadd.f32 %v1490, %v1607
      %v1645 = vadd.f32 %v1491, %v1610
      %v1646 = vadd.f32 %v1492, %v1613
      %v1647 = vadd.f32 %v1493, %v1616
      %v1648 = vadd.f32 %v1494, %v1619
      %v1649 = vadd.f32 %v1495, %v1622
      %v1650 = vadd.f32 %v1496, %v1625
      %v1651 = vadd.f32 %v1497, %v1628
      %v1652 = vadd.f32 %v1498, %v1631
      %v1653 = vadd.f32 %v1499, %v1634
      %v1654 = vadd.f32 %v1500, %v1637
      %s1655 = scalar_lea.vmem [#allocation2], 48
      %v1656 = vld [vmem:[%s1655] sm:$0xff]
      %v1657 = vld [vmem:[%s1655 + $0x8] sm:$0xff]
      %v1658 = vld [vmem:[%s1655 + $0x10] sm:$0xff]
      %v1659 = vld [vmem:[%s1655 + $0x18] sm:$0xff]
      %v1660 = vld [vmem:[%s1655 + $0x20] sm:$0xff]
      %v1661 = vld [vmem:[%s1655 + $0x28] sm:$0xff]
      %v1662 = vld [vmem:[%s1655 + $0x30] sm:$0xff]
      %v1663 = vld [vmem:[%s1655 + $0x38] sm:$0xff]
      %v1664 = vld [vmem:[%s1655 + $0x40] sm:$0xff]
      %v1665 = vld [vmem:[%s1655 + $0x48] sm:$0xff]
      %v1666 = vld [vmem:[%s1655 + $0x50] sm:$0xff]
      %v1667 = vld [vmem:[%s1655 + $0x58] sm:$0xff]
      %v1668 = vld [vmem:[%s1655 + $0x60] sm:$0xff]
      %v1669 = vld [vmem:[%s1655 + $0x68] sm:$0xff]
      %v1670 = vld [vmem:[%s1655 + $0x70] sm:$0xff]
      %v1671 = vld [vmem:[%s1655 + $0x78] sm:$0xff]
      %v1672 = vld [vmem:[%s1655 + $0x80] sm:$0xff]
      %v1673 = vld [vmem:[%s1655 + $0x88] sm:$0xff]
      %v1674 = vld [vmem:[%s1655 + $0x90] sm:$0xff]
      %v1675 = vld [vmem:[%s1655 + $0x98] sm:$0xff]
      %v1676 = vld [vmem:[%s1655 + $0xa0] sm:$0xff]
      %v1677 = vld [vmem:[%s1655 + $0xa8] sm:$0xff]
      %v1678 = vld [vmem:[%s1655 + $0xb0] sm:$0xff]
      %v1679 = vld [vmem:[%s1655 + $0xb8] sm:$0xff]
      %s1680 = scalar_lea.vmem %s2, 768
      %v1681 = vld [vmem:[%s1680] sm:$0xff]
      %v1682 = vld [vmem:[%s1680 + $0x8] sm:$0xff]
      %v1683 = vld [vmem:[%s1680 + $0x10] sm:$0xff]
      %v1684 = vld [vmem:[%s1680 + $0x18] sm:$0xff]
      %v1685 = vld [vmem:[%s1680 + $0x20] sm:$0xff]
      %v1686 = vld [vmem:[%s1680 + $0x28] sm:$0xff]
      %v1687 = vld [vmem:[%s1680 + $0x30] sm:$0xff]
      %v1688 = vld [vmem:[%s1680 + $0x38] sm:$0xff]
      %v1689 = vld [vmem:[%s1680 + $0x40] sm:$0xff]
      %v1690 = vld [vmem:[%s1680 + $0x48] sm:$0xff]
      %v1691 = vld [vmem:[%s1680 + $0x50] sm:$0xff]
      %v1692 = vld [vmem:[%s1680 + $0x58] sm:$0xff]
      %v1693 = vld [vmem:[%s1680 + $0x60] sm:$0xff]
      %v1694 = vld [vmem:[%s1680 + $0x68] sm:$0xff]
      %v1695 = vld [vmem:[%s1680 + $0x70] sm:$0xff]
      %v1696 = vld [vmem:[%s1680 + $0x78] sm:$0xff]
      %1697 = vmatpush.msra.mxu0 %v1696
      %1698 = vmatpush.msra.mxu0 %v1695
      %1699 = vmatpush.msra.mxu0 %v1694
      %1700 = vmatpush.msra.mxu0 %v1693
      %1701 = vmatpush.msra.mxu0 %v1692
      %1702 = vmatpush.msra.mxu0 %v1691
      %1703 = vmatpush.msra.mxu0 %v1690
      %1704 = vmatpush.msra.mxu0 %v1689
      %1705 = vmatpush.msra.mxu0 %v1688
      %1706 = vmatpush.msra.mxu0 %v1687
      %1707 = vmatpush.msra.mxu0 %v1686
      %1708 = vmatpush.msra.mxu0 %v1685
      %1709 = vmatpush.msra.mxu0 %v1684
      %1710 = vmatpush.msra.mxu0 %v1683
      %1711 = vmatpush.msra.mxu0 %v1682
      %1712 = vmatpush.msra.mxu0 %v1681
      %1713 = vmatmul.f32.gmra.mxu0 %v1656
      %v1714 = vpop.f32.mrf.mxu0
      %v1715 = vadd.f32 0.0, %v1714
      %1716 = vmatmul.f32.gmra.mxu0 %v1657
      %v1717 = vpop.f32.mrf.mxu0
      %v1718 = vadd.f32 0.0, %v1717
      %1719 = vmatmul.f32.gmra.mxu0 %v1659
      %v1720 = vpop.f32.mrf.mxu0
      %v1721 = vadd.f32 0.0, %v1720
      %1722 = vmatmul.f32.gmra.mxu0 %v1660
      %v1723 = vpop.f32.mrf.mxu0
      %v1724 = vadd.f32 0.0, %v1723
      %1725 = vmatmul.f32.gmra.mxu0 %v1662
      %v1726 = vpop.f32.mrf.mxu0
      %v1727 = vadd.f32 0.0, %v1726
      %1728 = vmatmul.f32.gmra.mxu0 %v1663
      %v1729 = vpop.f32.mrf.mxu0
      %v1730 = vadd.f32 0.0, %v1729
      %1731 = vmatmul.f32.gmra.mxu0 %v1665
      %v1732 = vpop.f32.mrf.mxu0
      %v1733 = vadd.f32 0.0, %v1732
      %1734 = vmatmul.f32.gmra.mxu0 %v1666
      %v1735 = vpop.f32.mrf.mxu0
      %v1736 = vadd.f32 0.0, %v1735
      %1737 = vmatmul.f32.gmra.mxu0 %v1668
      %v1738 = vpop.f32.mrf.mxu0
      %v1739 = vadd.f32 0.0, %v1738
      %1740 = vmatmul.f32.gmra.mxu0 %v1669
      %v1741 = vpop.f32.mrf.mxu0
      %v1742 = vadd.f32 0.0, %v1741
      %1743 = vmatmul.f32.gmra.mxu0 %v1671
      %v1744 = vpop.f32.mrf.mxu0
      %v1745 = vadd.f32 0.0, %v1744
      %1746 = vmatmul.f32.gmra.mxu0 %v1672
      %v1747 = vpop.f32.mrf.mxu0
      %v1748 = vadd.f32 0.0, %v1747
      %1749 = vmatmul.f32.gmra.mxu0 %v1674
      %v1750 = vpop.f32.mrf.mxu0
      %v1751 = vadd.f32 0.0, %v1750
      %1752 = vmatmul.f32.gmra.mxu0 %v1675
      %v1753 = vpop.f32.mrf.mxu0
      %v1754 = vadd.f32 0.0, %v1753
      %1755 = vmatmul.f32.gmra.mxu0 %v1677
      %v1756 = vpop.f32.mrf.mxu0
      %v1757 = vadd.f32 0.0, %v1756
      %1758 = vmatmul.f32.gmra.mxu0 %v1678
      %v1759 = vpop.f32.mrf.mxu0
      %v1760 = vadd.f32 0.0, %v1759
      %1761 = vdwg.mxu0
      %v1762 = vadd.f32 %v1639, %v1715
      %v1763 = vadd.f32 %v1640, %v1718
      %v1764 = vadd.f32 %v1641, %v1721
      %v1765 = vadd.f32 %v1642, %v1724
      %v1766 = vadd.f32 %v1643, %v1727
      %v1767 = vadd.f32 %v1644, %v1730
      %v1768 = vadd.f32 %v1645, %v1733
      %v1769 = vadd.f32 %v1646, %v1736
      %v1770 = vadd.f32 %v1647, %v1739
      %v1771 = vadd.f32 %v1648, %v1742
      %v1772 = vadd.f32 %v1649, %v1745
      %v1773 = vadd.f32 %v1650, %v1748
      %v1774 = vadd.f32 %v1651, %v1751
      %v1775 = vadd.f32 %v1652, %v1754
      %v1776 = vadd.f32 %v1653, %v1757
      %v1777 = vadd.f32 %v1654, %v1760
      %v1802 = vrot.slane %v1656, 1
      %v1803 = vrot.slane %v1657, 1
      %v1804 = vsel %vm841, %v1802, %v1803
      %v1805 = vrot.slane %v1658, 1
      %v1806 = vsel %vm841, %v1803, %v1805
      %v1807 = vrot.slane %v1659, 1
      %v1808 = vrot.slane %v1660, 1
      %v1809 = vsel %vm841, %v1807, %v1808
      %v1810 = vrot.slane %v1661, 1
      %v1811 = vsel %vm841, %v1808, %v1810
      %v1812 = vrot.slane %v1662, 1
      %v1813 = vrot.slane %v1663, 1
      %v1814 = vsel %vm841, %v1812, %v1813
      %v1815 = vrot.slane %v1664, 1
      %v1816 = vsel %vm841, %v1813, %v1815
      %v1817 = vrot.slane %v1665, 1
      %v1818 = vrot.slane %v1666, 1
      %v1819 = vsel %vm841, %v1817, %v1818
      %v1820 = vrot.slane %v1667, 1
      %v1821 = vsel %vm841, %v1818, %v1820
      %v1822 = vrot.slane %v1668, 1
      %v1823 = vrot.slane %v1669, 1
      %v1824 = vsel %vm841, %v1822, %v1823
      %v1825 = vrot.slane %v1670, 1
      %v1826 = vsel %vm841, %v1823, %v1825
      %v1827 = vrot.slane %v1671, 1
      %v1828 = vrot.slane %v1672, 1
      %v1829 = vsel %vm841, %v1827, %v1828
      %v1830 = vrot.slane %v1673, 1
      %v1831 = vsel %vm841, %v1828, %v1830
      %v1832 = vrot.slane %v1674, 1
      %v1833 = vrot.slane %v1675, 1
      %v1834 = vsel %vm841, %v1832, %v1833
      %v1835 = vrot.slane %v1676, 1
      %v1836 = vsel %vm841, %v1833, %v1835
      %v1837 = vrot.slane %v1677, 1
      %v1838 = vrot.slane %v1678, 1
      %v1839 = vsel %vm841, %v1837, %v1838
      %v1840 = vrot.slane %v1679, 1
      %v1841 = vsel %vm841, %v1838, %v1840
      %s1858 = scalar_lea.vmem %s2, 896
      %v1859 = vld [vmem:[%s1858] sm:$0xff]
      %v1860 = vld [vmem:[%s1858 + $0x8] sm:$0xff]
      %v1861 = vld [vmem:[%s1858 + $0x10] sm:$0xff]
      %v1862 = vld [vmem:[%s1858 + $0x18] sm:$0xff]
      %v1863 = vld [vmem:[%s1858 + $0x20] sm:$0xff]
      %v1864 = vld [vmem:[%s1858 + $0x28] sm:$0xff]
      %v1865 = vld [vmem:[%s1858 + $0x30] sm:$0xff]
      %v1866 = vld [vmem:[%s1858 + $0x38] sm:$0xff]
      %v1867 = vld [vmem:[%s1858 + $0x40] sm:$0xff]
      %v1868 = vld [vmem:[%s1858 + $0x48] sm:$0xff]
      %v1869 = vld [vmem:[%s1858 + $0x50] sm:$0xff]
      %v1870 = vld [vmem:[%s1858 + $0x58] sm:$0xff]
      %v1871 = vld [vmem:[%s1858 + $0x60] sm:$0xff]
      %v1872 = vld [vmem:[%s1858 + $0x68] sm:$0xff]
      %v1873 = vld [vmem:[%s1858 + $0x70] sm:$0xff]
      %v1874 = vld [vmem:[%s1858 + $0x78] sm:$0xff]
      %1875 = vmatpush.msra.mxu0 %v1874
      %1876 = vmatpush.msra.mxu0 %v1873
      %1877 = vmatpush.msra.mxu0 %v1872
      %1878 = vmatpush.msra.mxu0 %v1871
      %1879 = vmatpush.msra.mxu0 %v1870
      %1880 = vmatpush.msra.mxu0 %v1869
      %1881 = vmatpush.msra.mxu0 %v1868
      %1882 = vmatpush.msra.mxu0 %v1867
      %1883 = vmatpush.msra.mxu0 %v1866
      %1884 = vmatpush.msra.mxu0 %v1865
      %1885 = vmatpush.msra.mxu0 %v1864
      %1886 = vmatpush.msra.mxu0 %v1863
      %1887 = vmatpush.msra.mxu0 %v1862
      %1888 = vmatpush.msra.mxu0 %v1861
      %1889 = vmatpush.msra.mxu0 %v1860
      %1890 = vmatpush.msra.mxu0 %v1859
      %1891 = vmatmul.f32.gmra.mxu0 %v1804
      %v1892 = vpop.f32.mrf.mxu0
      %v1893 = vadd.f32 0.0, %v1892
      %1894 = vmatmul.f32.gmra.mxu0 %v1806
      %v1895 = vpop.f32.mrf.mxu0
      %v1896 = vadd.f32 0.0, %v1895
      %1897 = vmatmul.f32.gmra.mxu0 %v1809
      %v1898 = vpop.f32.mrf.mxu0
      %v1899 = vadd.f32 0.0, %v1898
      %1900 = vmatmul.f32.gmra.mxu0 %v1811
      %v1901 = vpop.f32.mrf.mxu0
      %v1902 = vadd.f32 0.0, %v1901
      %1903 = vmatmul.f32.gmra.mxu0 %v1814
      %v1904 = vpop.f32.mrf.mxu0
      %v1905 = vadd.f32 0.0, %v1904
      %1906 = vmatmul.f32.gmra.mxu0 %v1816
      %v1907 = vpop.f32.mrf.mxu0
      %v1908 = vadd.f32 0.0, %v1907
      %1909 = vmatmul.f32.gmra.mxu0 %v1819
      %v1910 = vpop.f32.mrf.mxu0
      %v1911 = vadd.f32 0.0, %v1910
      %1912 = vmatmul.f32.gmra.mxu0 %v1821
      %v1913 = vpop.f32.mrf.mxu0
      %v1914 = vadd.f32 0.0, %v1913
      %1915 = vmatmul.f32.gmra.mxu0 %v1824
      %v1916 = vpop.f32.mrf.mxu0
      %v1917 = vadd.f32 0.0, %v1916
      %1918 = vmatmul.f32.gmra.mxu0 %v1826
      %v1919 = vpop.f32.mrf.mxu0
      %v1920 = vadd.f32 0.0, %v1919
      %1921 = vmatmul.f32.gmra.mxu0 %v1829
      %v1922 = vpop.f32.mrf.mxu0
      %v1923 = vadd.f32 0.0, %v1922
      %1924 = vmatmul.f32.gmra.mxu0 %v1831
      %v1925 = vpop.f32.mrf.mxu0
      %v1926 = vadd.f32 0.0, %v1925
      %1927 = vmatmul.f32.gmra.mxu0 %v1834
      %v1928 = vpop.f32.mrf.mxu0
      %v1929 = vadd.f32 0.0, %v1928
      %1930 = vmatmul.f32.gmra.mxu0 %v1836
      %v1931 = vpop.f32.mrf.mxu0
      %v1932 = vadd.f32 0.0, %v1931
      %1933 = vmatmul.f32.gmra.mxu0 %v1839
      %v1934 = vpop.f32.mrf.mxu0
      %v1935 = vadd.f32 0.0, %v1934
      %1936 = vmatmul.f32.gmra.mxu0 %v1841
      %v1937 = vpop.f32.mrf.mxu0
      %v1938 = vadd.f32 0.0, %v1937
      %1939 = vdwg.mxu0
      %v1940 = vadd.f32 %v1762, %v1893
      %v1941 = vadd.f32 %v1763, %v1896
      %v1942 = vadd.f32 %v1764, %v1899
      %v1943 = vadd.f32 %v1765, %v1902
      %v1944 = vadd.f32 %v1766, %v1905
      %v1945 = vadd.f32 %v1767, %v1908
      %v1946 = vadd.f32 %v1768, %v1911
      %v1947 = vadd.f32 %v1769, %v1914
      %v1948 = vadd.f32 %v1770, %v1917
      %v1949 = vadd.f32 %v1771, %v1920
      %v1950 = vadd.f32 %v1772, %v1923
      %v1951 = vadd.f32 %v1773, %v1926
      %v1952 = vadd.f32 %v1774, %v1929
      %v1953 = vadd.f32 %v1775, %v1932
      %v1954 = vadd.f32 %v1776, %v1935
      %v1955 = vadd.f32 %v1777, %v1938
      %v1956 = vrot.slane %v1656, 2
      %v1957 = vrot.slane %v1657, 2
      %v1958 = vsel %vm1045, %v1956, %v1957
      %v1959 = vrot.slane %v1658, 2
      %v1960 = vsel %vm1045, %v1957, %v1959
      %v1961 = vrot.slane %v1659, 2
      %v1962 = vrot.slane %v1660, 2
      %v1963 = vsel %vm1045, %v1961, %v1962
      %v1964 = vrot.slane %v1661, 2
      %v1965 = vsel %vm1045, %v1962, %v1964
      %v1966 = vrot.slane %v1662, 2
      %v1967 = vrot.slane %v1663, 2
      %v1968 = vsel %vm1045, %v1966, %v1967
      %v1969 = vrot.slane %v1664, 2
      %v1970 = vsel %vm1045, %v1967, %v1969
      %v1971 = vrot.slane %v1665, 2
      %v1972 = vrot.slane %v1666, 2
      %v1973 = vsel %vm1045, %v1971, %v1972
      %v1974 = vrot.slane %v1667, 2
      %v1975 = vsel %vm1045, %v1972, %v1974
      %v1976 = vrot.slane %v1668, 2
      %v1977 = vrot.slane %v1669, 2
      %v1978 = vsel %vm1045, %v1976, %v1977
      %v1979 = vrot.slane %v1670, 2
      %v1980 = vsel %vm1045, %v1977, %v1979
      %v1981 = vrot.slane %v1671, 2
      %v1982 = vrot.slane %v1672, 2
      %v1983 = vsel %vm1045, %v1981, %v1982
      %v1984 = vrot.slane %v1673, 2
      %v1985 = vsel %vm1045, %v1982, %v1984
      %v1986 = vrot.slane %v1674, 2
      %v1987 = vrot.slane %v1675, 2
      %v1988 = vsel %vm1045, %v1986, %v1987
      %v1989 = vrot.slane %v1676, 2
      %v1990 = vsel %vm1045, %v1987, %v1989
      %v1991 = vrot.slane %v1677, 2
      %v1992 = vrot.slane %v1678, 2
      %v1993 = vsel %vm1045, %v1991, %v1992
      %v1994 = vrot.slane %v1679, 2
      %v1995 = vsel %vm1045, %v1992, %v1994
      %s2012 = scalar_lea.vmem %s2, 1024
      %v2013 = vld [vmem:[%s2012] sm:$0xff]
      %v2014 = vld [vmem:[%s2012 + $0x8] sm:$0xff]
      %v2015 = vld [vmem:[%s2012 + $0x10] sm:$0xff]
      %v2016 = vld [vmem:[%s2012 + $0x18] sm:$0xff]
      %v2017 = vld [vmem:[%s2012 + $0x20] sm:$0xff]
      %v2018 = vld [vmem:[%s2012 + $0x28] sm:$0xff]
      %v2019 = vld [vmem:[%s2012 + $0x30] sm:$0xff]
      %v2020 = vld [vmem:[%s2012 + $0x38] sm:$0xff]
      %v2021 = vld [vmem:[%s2012 + $0x40] sm:$0xff]
      %v2022 = vld [vmem:[%s2012 + $0x48] sm:$0xff]
      %v2023 = vld [vmem:[%s2012 + $0x50] sm:$0xff]
      %v2024 = vld [vmem:[%s2012 + $0x58] sm:$0xff]
      %v2025 = vld [vmem:[%s2012 + $0x60] sm:$0xff]
      %v2026 = vld [vmem:[%s2012 + $0x68] sm:$0xff]
      %v2027 = vld [vmem:[%s2012 + $0x70] sm:$0xff]
      %v2028 = vld [vmem:[%s2012 + $0x78] sm:$0xff]
      %2029 = vmatpush.msra.mxu0 %v2028
      %2030 = vmatpush.msra.mxu0 %v2027
      %2031 = vmatpush.msra.mxu0 %v2026
      %2032 = vmatpush.msra.mxu0 %v2025
      %2033 = vmatpush.msra.mxu0 %v2024
      %2034 = vmatpush.msra.mxu0 %v2023
      %2035 = vmatpush.msra.mxu0 %v2022
      %2036 = vmatpush.msra.mxu0 %v2021
      %2037 = vmatpush.msra.mxu0 %v2020
      %2038 = vmatpush.msra.mxu0 %v2019
      %2039 = vmatpush.msra.mxu0 %v2018
      %2040 = vmatpush.msra.mxu0 %v2017
      %2041 = vmatpush.msra.mxu0 %v2016
      %2042 = vmatpush.msra.mxu0 %v2015
      %2043 = vmatpush.msra.mxu0 %v2014
      %2044 = vmatpush.msra.mxu0 %v2013
      %2045 = vmatmul.f32.gmra.mxu0 %v1958
      %v2046 = vpop.f32.mrf.mxu0
      %v2047 = vadd.f32 0.0, %v2046
      %2048 = vmatmul.f32.gmra.mxu0 %v1960
      %v2049 = vpop.f32.mrf.mxu0
      %v2050 = vadd.f32 0.0, %v2049
      %2051 = vmatmul.f32.gmra.mxu0 %v1963
      %v2052 = vpop.f32.mrf.mxu0
      %v2053 = vadd.f32 0.0, %v2052
      %2054 = vmatmul.f32.gmra.mxu0 %v1965
      %v2055 = vpop.f32.mrf.mxu0
      %v2056 = vadd.f32 0.0, %v2055
      %2057 = vmatmul.f32.gmra.mxu0 %v1968
      %v2058 = vpop.f32.mrf.mxu0
      %v2059 = vadd.f32 0.0, %v2058
      %2060 = vmatmul.f32.gmra.mxu0 %v1970
      %v2061 = vpop.f32.mrf.mxu0
      %v2062 = vadd.f32 0.0, %v2061
      %2063 = vmatmul.f32.gmra.mxu0 %v1973
      %v2064 = vpop.f32.mrf.mxu0
      %v2065 = vadd.f32 0.0, %v2064
      %2066 = vmatmul.f32.gmra.mxu0 %v1975
      %v2067 = vpop.f32.mrf.mxu0
      %v2068 = vadd.f32 0.0, %v2067
      %2069 = vmatmul.f32.gmra.mxu0 %v1978
      %v2070 = vpop.f32.mrf.mxu0
      %v2071 = vadd.f32 0.0, %v2070
      %2072 = vmatmul.f32.gmra.mxu0 %v1980
      %v2073 = vpop.f32.mrf.mxu0
      %v2074 = vadd.f32 0.0, %v2073
      %2075 = vmatmul.f32.gmra.mxu0 %v1983
      %v2076 = vpop.f32.mrf.mxu0
      %v2077 = vadd.f32 0.0, %v2076
      %2078 = vmatmul.f32.gmra.mxu0 %v1985
      %v2079 = vpop.f32.mrf.mxu0
      %v2080 = vadd.f32 0.0, %v2079
      %2081 = vmatmul.f32.gmra.mxu0 %v1988
      %v2082 = vpop.f32.mrf.mxu0
      %v2083 = vadd.f32 0.0, %v2082
      %2084 = vmatmul.f32.gmra.mxu0 %v1990
      %v2085 = vpop.f32.mrf.mxu0
      %v2086 = vadd.f32 0.0, %v2085
      %2087 = vmatmul.f32.gmra.mxu0 %v1993
      %v2088 = vpop.f32.mrf.mxu0
      %v2089 = vadd.f32 0.0, %v2088
      %2090 = vmatmul.f32.gmra.mxu0 %v1995
      %v2091 = vpop.f32.mrf.mxu0
      %v2092 = vadd.f32 0.0, %v2091
      %2093 = vdwg.mxu0
      %v2094 = vadd.f32 %v1940, %v2047
      %v2095 = vadd.f32 %v1941, %v2050
      %v2096 = vadd.f32 %v1942, %v2053
      %v2097 = vadd.f32 %v1943, %v2056
      %v2098 = vadd.f32 %v1944, %v2059
      %v2099 = vadd.f32 %v1945, %v2062
      %v2100 = vadd.f32 %v1946, %v2065
      %v2101 = vadd.f32 %v1947, %v2068
      %v2102 = vadd.f32 %v1948, %v2071
      %v2103 = vadd.f32 %v1949, %v2074
      %v2104 = vadd.f32 %v1950, %v2077
      %v2105 = vadd.f32 %v1951, %v2080
      %v2106 = vadd.f32 %v1952, %v2083
      %v2107 = vadd.f32 %v1953, %v2086
      %v2108 = vadd.f32 %v1954, %v2089
      %v2109 = vadd.f32 %v1955, %v2092
      %v2111 = vperm.slane %v447, 0
      %v2113 = vmul.f32 %v2094, %v2111
      %v2114 = vmul.f32 %v2095, %v2111
      %v2115 = vmul.f32 %v2096, %v2111
      %v2116 = vmul.f32 %v2097, %v2111
      %v2117 = vmul.f32 %v2098, %v2111
      %v2118 = vmul.f32 %v2099, %v2111
      %v2119 = vmul.f32 %v2100, %v2111
      %v2120 = vmul.f32 %v2101, %v2111
      %v2121 = vmul.f32 %v2102, %v2111
      %v2122 = vmul.f32 %v2103, %v2111
      %v2123 = vmul.f32 %v2104, %v2111
      %v2124 = vmul.f32 %v2105, %v2111
      %v2125 = vmul.f32 %v2106, %v2111
      %v2126 = vmul.f32 %v2107, %v2111
      %v2127 = vmul.f32 %v2108, %v2111
      %v2128 = vmul.f32 %v2109, %v2111
      %v2130 = vperm.slane %v448, 0
      %v2132 = vadd.f32 %v2113, %v2130
      %v2133 = vadd.f32 %v2114, %v2130
      %v2134 = vadd.f32 %v2115, %v2130
      %v2135 = vadd.f32 %v2116, %v2130
      %v2136 = vadd.f32 %v2117, %v2130
      %v2137 = vadd.f32 %v2118, %v2130
      %v2138 = vadd.f32 %v2119, %v2130
      %v2139 = vadd.f32 %v2120, %v2130
      %v2140 = vadd.f32 %v2121, %v2130
      %v2141 = vadd.f32 %v2122, %v2130
      %v2142 = vadd.f32 %v2123, %v2130
      %v2143 = vadd.f32 %v2124, %v2130
      %v2144 = vadd.f32 %v2125, %v2130
      %v2145 = vadd.f32 %v2126, %v2130
      %v2146 = vadd.f32 %v2127, %v2130
      %v2147 = vadd.f32 %v2128, %v2130
      %v2148 = vmax.f32 %v2132, 0.0
      %v2149 = vmax.f32 %v2133, 0.0
      %v2150 = vmax.f32 %v2134, 0.0
      %v2151 = vmax.f32 %v2135, 0.0
      %v2152 = vmax.f32 %v2136, 0.0
      %v2153 = vmax.f32 %v2137, 0.0
      %v2154 = vmax.f32 %v2138, 0.0
      %v2155 = vmax.f32 %v2139, 0.0
      %v2156 = vmax.f32 %v2140, 0.0
      %v2157 = vmax.f32 %v2141, 0.0
      %v2158 = vmax.f32 %v2142, 0.0
      %v2159 = vmax.f32 %v2143, 0.0
      %v2160 = vmax.f32 %v2144, 0.0
      %v2161 = vmax.f32 %v2145, 0.0
      %v2162 = vmax.f32 %v2146, 0.0
      %v2163 = vmax.f32 %v2147, 0.0
      %2164 = vmatpush.msra.mxu0 %v444
      %2165 = vmatpush.msra.mxu0 %v443
      %2166 = vmatpush.msra.mxu0 %v442
      %2167 = vmatpush.msra.mxu0 %v441
      %2168 = vmatpush.msra.mxu0 %v440
      %2169 = vmatpush.msra.mxu0 %v439
      %2170 = vmatpush.msra.mxu0 %v438
      %2171 = vmatpush.msra.mxu0 %v437
      %2172 = vmatpush.msra.mxu0 %v436
      %2173 = vmatpush.msra.mxu0 %v435
      %2174 = vmatpush.msra.mxu0 %v434
      %2175 = vmatpush.msra.mxu0 %v433
      %2176 = vmatpush.msra.mxu0 %v432
      %2177 = vmatpush.msra.mxu0 %v431
      %2178 = vmatpush.msra.mxu0 %v430
      %2179 = vmatpush.msra.mxu0 %v429
      %2180 = vmatmul.f32.gmra.mxu0 %v2148
      %v2181 = vpop.f32.mrf.mxu0
      %v2182 = vadd.f32 0.0, %v2181
      %2183 = vmatmul.f32.gmra.mxu0 %v2149
      %v2184 = vpop.f32.mrf.mxu0
      %v2185 = vadd.f32 0.0, %v2184
      %2186 = vmatmul.f32.gmra.mxu0 %v2150
      %v2187 = vpop.f32.mrf.mxu0
      %v2188 = vadd.f32 0.0, %v2187
      %2189 = vmatmul.f32.gmra.mxu0 %v2151
      %v2190 = vpop.f32.mrf.mxu0
      %v2191 = vadd.f32 0.0, %v2190
      %2192 = vmatmul.f32.gmra.mxu0 %v2152
      %v2193 = vpop.f32.mrf.mxu0
      %v2194 = vadd.f32 0.0, %v2193
      %2195 = vmatmul.f32.gmra.mxu0 %v2153
      %v2196 = vpop.f32.mrf.mxu0
      %v2197 = vadd.f32 0.0, %v2196
      %2198 = vmatmul.f32.gmra.mxu0 %v2154
      %v2199 = vpop.f32.mrf.mxu0
      %v2200 = vadd.f32 0.0, %v2199
      %2201 = vmatmul.f32.gmra.mxu0 %v2155
      %v2202 = vpop.f32.mrf.mxu0
      %v2203 = vadd.f32 0.0, %v2202
      %2204 = vmatmul.f32.gmra.mxu0 %v2156
      %v2205 = vpop.f32.mrf.mxu0
      %v2206 = vadd.f32 0.0, %v2205
      %2207 = vmatmul.f32.gmra.mxu0 %v2157
      %v2208 = vpop.f32.mrf.mxu0
      %v2209 = vadd.f32 0.0, %v2208
      %2210 = vmatmul.f32.gmra.mxu0 %v2158
      %v2211 = vpop.f32.mrf.mxu0
      %v2212 = vadd.f32 0.0, %v2211
      %2213 = vmatmul.f32.gmra.mxu0 %v2159
      %v2214 = vpop.f32.mrf.mxu0
      %v2215 = vadd.f32 0.0, %v2214
      %2216 = vmatmul.f32.gmra.mxu0 %v2160
      %v2217 = vpop.f32.mrf.mxu0
      %v2218 = vadd.f32 0.0, %v2217
      %2219 = vmatmul.f32.gmra.mxu0 %v2161
      %v2220 = vpop.f32.mrf.mxu0
      %v2221 = vadd.f32 0.0, %v2220
      %2222 = vmatmul.f32.gmra.mxu0 %v2162
      %v2223 = vpop.f32.mrf.mxu0
      %v2224 = vadd.f32 0.0, %v2223
      %2225 = vmatmul.f32.gmra.mxu0 %v2163
      %v2226 = vpop.f32.mrf.mxu0
      %v2227 = vadd.f32 0.0, %v2226
      %2228 = vdwg.mxu0
      %s2229 = sadd.s32 %s412, 1
      %s2230 = smul.u32 %s2229, 24
      %s2231 = scalar_lea.vmem %s400, %s2230
      %v2232 = vld [vmem:[%s2231] sm:$0xff]
      %v2233 = vld [vmem:[%s2231 + $0x8] sm:$0xff]
      %v2234 = vld [vmem:[%s2231 + $0x10] sm:$0xff]
      %v2235 = vld [vmem:[%s2231 + $0x18] sm:$0xff]
      %v2236 = vld [vmem:[%s2231 + $0x20] sm:$0xff]
      %v2237 = vld [vmem:[%s2231 + $0x28] sm:$0xff]
      %v2238 = vld [vmem:[%s2231 + $0x30] sm:$0xff]
      %v2239 = vld [vmem:[%s2231 + $0x38] sm:$0xff]
      %v2240 = vld [vmem:[%s2231 + $0x40] sm:$0xff]
      %v2241 = vld [vmem:[%s2231 + $0x48] sm:$0xff]
      %v2242 = vld [vmem:[%s2231 + $0x50] sm:$0xff]
      %v2243 = vld [vmem:[%s2231 + $0x58] sm:$0xff]
      %v2244 = vld [vmem:[%s2231 + $0x60] sm:$0xff]
      %v2245 = vld [vmem:[%s2231 + $0x68] sm:$0xff]
      %v2246 = vld [vmem:[%s2231 + $0x70] sm:$0xff]
      %v2247 = vld [vmem:[%s2231 + $0x78] sm:$0xff]
      %v2248 = vld [vmem:[%s2231 + $0x80] sm:$0xff]
      %v2249 = vld [vmem:[%s2231 + $0x88] sm:$0xff]
      %v2250 = vld [vmem:[%s2231 + $0x90] sm:$0xff]
      %v2251 = vld [vmem:[%s2231 + $0x98] sm:$0xff]
      %v2252 = vld [vmem:[%s2231 + $0xa0] sm:$0xff]
      %v2253 = vld [vmem:[%s2231 + $0xa8] sm:$0xff]
      %v2254 = vld [vmem:[%s2231 + $0xb0] sm:$0xff]
      %v2255 = vld [vmem:[%s2231 + $0xb8] sm:$0xff]
      %v2280 = vrot.slane %v2232, 1
      %v2281 = vrot.slane %v2233, 1
      %v2282 = vsel %vm841, %v2280, %v2281
      %v2283 = vrot.slane %v2234, 1
      %v2284 = vsel %vm841, %v2281, %v2283
      %v2285 = vrot.slane %v2235, 1
      %v2286 = vrot.slane %v2236, 1
      %v2287 = vsel %vm841, %v2285, %v2286
      %v2288 = vrot.slane %v2237, 1
      %v2289 = vsel %vm841, %v2286, %v2288
      %v2290 = vrot.slane %v2238, 1
      %v2291 = vrot.slane %v2239, 1
      %v2292 = vsel %vm841, %v2290, %v2291
      %v2293 = vrot.slane %v2240, 1
      %v2294 = vsel %vm841, %v2291, %v2293
      %v2295 = vrot.slane %v2241, 1
      %v2296 = vrot.slane %v2242, 1
      %v2297 = vsel %vm841, %v2295, %v2296
      %v2298 = vrot.slane %v2243, 1
      %v2299 = vsel %vm841, %v2296, %v2298
      %v2300 = vrot.slane %v2244, 1
      %v2301 = vrot.slane %v2245, 1
      %v2302 = vsel %vm841, %v2300, %v2301
      %v2303 = vrot.slane %v2246, 1
      %v2304 = vsel %vm841, %v2301, %v2303
      %v2305 = vrot.slane %v2247, 1
      %v2306 = vrot.slane %v2248, 1
      %v2307 = vsel %vm841, %v2305, %v2306
      %v2308 = vrot.slane %v2249, 1
      %v2309 = vsel %vm841, %v2306, %v2308
      %v2310 = vrot.slane %v2250, 1
      %v2311 = vrot.slane %v2251, 1
      %v2312 = vsel %vm841, %v2310, %v2311
      %v2313 = vrot.slane %v2252, 1
      %v2314 = vsel %vm841, %v2311, %v2313
      %v2315 = vrot.slane %v2253, 1
      %v2316 = vrot.slane %v2254, 1
      %v2317 = vsel %vm841, %v2315, %v2316
      %v2318 = vrot.slane %v2255, 1
      %v2319 = vsel %vm841, %v2316, %v2318
      %v2337 = vperm.slane %v449, 0
      %v2339 = vmul.f32 %v2182, %v2337
      %v2340 = vmul.f32 %v2185, %v2337
      %v2341 = vmul.f32 %v2188, %v2337
      %v2342 = vmul.f32 %v2191, %v2337
      %v2343 = vmul.f32 %v2194, %v2337
      %v2344 = vmul.f32 %v2197, %v2337
      %v2345 = vmul.f32 %v2200, %v2337
      %v2346 = vmul.f32 %v2203, %v2337
      %v2347 = vmul.f32 %v2206, %v2337
      %v2348 = vmul.f32 %v2209, %v2337
      %v2349 = vmul.f32 %v2212, %v2337
      %v2350 = vmul.f32 %v2215, %v2337
      %v2351 = vmul.f32 %v2218, %v2337
      %v2352 = vmul.f32 %v2221, %v2337
      %v2353 = vmul.f32 %v2224, %v2337
      %v2354 = vmul.f32 %v2227, %v2337
      %v2356 = vperm.slane %v450, 0
      %v2358 = vadd.f32 %v2339, %v2356
      %v2359 = vadd.f32 %v2340, %v2356
      %v2360 = vadd.f32 %v2341, %v2356
      %v2361 = vadd.f32 %v2342, %v2356
      %v2362 = vadd.f32 %v2343, %v2356
      %v2363 = vadd.f32 %v2344, %v2356
      %v2364 = vadd.f32 %v2345, %v2356
      %v2365 = vadd.f32 %v2346, %v2356
      %v2366 = vadd.f32 %v2347, %v2356
      %v2367 = vadd.f32 %v2348, %v2356
      %v2368 = vadd.f32 %v2349, %v2356
      %v2369 = vadd.f32 %v2350, %v2356
      %v2370 = vadd.f32 %v2351, %v2356
      %v2371 = vadd.f32 %v2352, %v2356
      %v2372 = vadd.f32 %v2353, %v2356
      %v2373 = vadd.f32 %v2354, %v2356
      %v2374 = vadd.f32 %v2358, %v2282
      %v2375 = vadd.f32 %v2359, %v2284
      %v2376 = vadd.f32 %v2360, %v2287
      %v2377 = vadd.f32 %v2361, %v2289
      %v2378 = vadd.f32 %v2362, %v2292
      %v2379 = vadd.f32 %v2363, %v2294
      %v2380 = vadd.f32 %v2364, %v2297
      %v2381 = vadd.f32 %v2365, %v2299
      %v2382 = vadd.f32 %v2366, %v2302
      %v2383 = vadd.f32 %v2367, %v2304
      %v2384 = vadd.f32 %v2368, %v2307
      %v2385 = vadd.f32 %v2369, %v2309
      %v2386 = vadd.f32 %v2370, %v2312
      %v2387 = vadd.f32 %v2371, %v2314
      %v2388 = vadd.f32 %v2372, %v2317
      %v2389 = vadd.f32 %v2373, %v2319
      %v2390 = vmax.f32 %v2374, 0.0
      %v2391 = vmax.f32 %v2375, 0.0
      %v2392 = vmax.f32 %v2376, 0.0
      %v2393 = vmax.f32 %v2377, 0.0
      %v2394 = vmax.f32 %v2378, 0.0
      %v2395 = vmax.f32 %v2379, 0.0
      %v2396 = vmax.f32 %v2380, 0.0
      %v2397 = vmax.f32 %v2381, 0.0
      %v2398 = vmax.f32 %v2382, 0.0
      %v2399 = vmax.f32 %v2383, 0.0
      %v2400 = vmax.f32 %v2384, 0.0
      %v2401 = vmax.f32 %v2385, 0.0
      %v2402 = vmax.f32 %v2386, 0.0
      %v2403 = vmax.f32 %v2387, 0.0
      %v2404 = vmax.f32 %v2388, 0.0
      %v2405 = vmax.f32 %v2389, 0.0
      %2406 = vst [vmem:[%s410] sm:$0xff] %v2390
      %2407 = vst [vmem:[%s410 + $0x8] sm:$0xff] %v2391
      %2408 = vst [vmem:[%s410 + $0x10] sm:$0xff] %v2392
      %2409 = vst [vmem:[%s410 + $0x18] sm:$0xff] %v2393
      %2410 = vst [vmem:[%s410 + $0x20] sm:$0xff] %v2394
      %2411 = vst [vmem:[%s410 + $0x28] sm:$0xff] %v2395
      %2412 = vst [vmem:[%s410 + $0x30] sm:$0xff] %v2396
      %2413 = vst [vmem:[%s410 + $0x38] sm:$0xff] %v2397
      %2414 = vst [vmem:[%s410 + $0x40] sm:$0xff] %v2398
      %2415 = vst [vmem:[%s410 + $0x48] sm:$0xff] %v2399
      %2416 = vst [vmem:[%s410 + $0x50] sm:$0xff] %v2400
      %2417 = vst [vmem:[%s410 + $0x58] sm:$0xff] %v2401
      %2418 = vst [vmem:[%s410 + $0x60] sm:$0xff] %v2402
      %2419 = vst [vmem:[%s410 + $0x68] sm:$0xff] %v2403
      %2420 = vst [vmem:[%s410 + $0x70] sm:$0xff] %v2404
      %2421 = vst [vmem:[%s410 + $0x78] sm:$0xff] %v2405
      %s2422 = smul.u32 8, %s27
      %p2423 = scmp.lt.s32.totalorder %s26, 1
      %s2424 = scalar_select %p2423, %s26, 1
      %p2425 = scmp.lt.s32.totalorder %s2422, 15
      %s2426 = scalar_select %p2425, %s2422, 15
      %s2427 = smul.addr %s2426, 2
      %s2428 = smul.addr %s2424, 32
      %s2429 = sadd.s32 %s2427, %s2428
      %s2430 = smul.addr %s2429, 8
      %s2431 = scalar_lea.vmem %s11, %s2430
      // Predicated region
      $region65: #{bottleneck_forward.1} parent=63 // pred_check
        %p2432 = pneg %p290
      $region66: #{bottleneck_forward.1} parent=63 // pred_check_branch
        %2434 = sbr.rel (%p2432) target = $region68
      $region67: #{bottleneck_forward.1} parent=63 // pred_region
        %s2435 = smul.u32 8, %s27
      $region68: #{bottleneck_forward.1} parent=63 // pred_fallthru
        _
    $region64: #{bottleneck_forward.1} parent=5 // pred_fallthru
      _
    %p2436 = scmp.le.s32.totalorder 2, %s17
    // Predicated region
    $region69: #{bottleneck_forward.1} parent=5 // pred_check
      %p2437 = pneg %p2436
    $region70: #{bottleneck_forward.1} parent=5 // pred_check_branch
      %2439 = sbr.rel (%p2437) target = $region72
    $region71: #{bottleneck_forward.1} parent=5 // pred_region
      %s2440 = ssub.s32 %s17, 2
      // Predicated region
      $region73: #{bottleneck_forward.1} parent=71 // pred_check
        %p2441 = pneg %p296
      $region74: #{bottleneck_forward.1} parent=71 // pred_check_branch
        %2443 = sbr.rel (%p2441) target = $region76
      $region75: #{bottleneck_forward.1} parent=71 // pred_region
        %s2444 = smul.u32 8, %s29
        %p2445 = scmp.lt.s32.totalorder %s28, 1
        %s2446 = scalar_select %p2445, %s28, 1
        %p2447 = scmp.lt.s32.totalorder %s2444, 15
        %s2448 = scalar_select %p2447, %s2444, 15
        %s2449 = smul.addr %s2448, 2
        %s2450 = smul.addr %s2446, 32
        %s2451 = sadd.s32 %s2449, %s2450
        %s2452 = smul.addr %s2451, 8
        %s2453 = scalar_lea.vmem %s11, %s2452
      $region76: #{bottleneck_forward.1} parent=71 // pred_fallthru
        _
    $region72: #{bottleneck_forward.1} parent=5 // pred_fallthru
      _
  $region6: #{bottleneck_forward.1} parent=0 // loop_footer
    %s21 = sadd.s32 1, %s17
  $region7: #{bottleneck_forward.1} parent=0 // loop_footer_branch
    %16 = sbr.rel target = $region3
  $region8: #{bottleneck_forward.1} parent=0 // loop_exit
    _

</llo_original>
